<compile_context>
chip_gen: v7x
topology: tpu7x:2x2x1
jax: 0.10.0
libtpu: 0.0.40
codegen_flags: <defaults>
</compile_context>

<pallas_src>
import functools

import jax
import jax.numpy as jnp
from jax.experimental import pallas as pl
from jax.experimental.pallas import tpu as pltpu


def _vmem_limit(nbytes):
    """Explicit scoped-VMEM limit: v5e defaults to only 16 MiB; 40 MiB cap
    leaves headroom under v7x's 64 MiB physical VMEM."""
    return int(min(max(4 * nbytes, 4 << 20), 40 << 20))


def _choose_tile_m(M, K, N, target=1024, budget_bytes=24 << 20):
    """Largest divisor of M <= target whose double-buffered (TM,K)+(TM,N) tiles
    plus the resident (K,N) weight fit the VMEM budget; prefers >= 2 grid
    blocks so both v7x TensorCores get work."""
    cap = min(target, max(8, M // 2))
    for t in range(cap, 7, -1):
        if M % t:
            continue
        if 4 * (2 * t * (K + N) + K * N) <= budget_bytes:
            return t
    return M


# --------------------------------------------------------------------------
# Parameter preparation (hoisted out of the per-forward path)
# --------------------------------------------------------------------------
def prepare_params(params, heads, dim_head, w_spatial):
    HD = heads * dim_head
    # fused QKV weight (read x once, no dead zero-bias)
    w_qkv_t = jnp.concatenate(
        [params["Wq"].T, params["Wk"].T, params["Wv"].T], axis=1)   # (c, 3*HD)
    w_proj_t = params["Wproj"].T                                    # (HD, c)
    b_proj = params["bproj"].reshape(1, -1)                         # (1, c)
    # per-column rescale (folded into k columns inside the kernel)
    rescale_row = jnp.repeat(params["rescale"], dim_head).reshape(1, HD)
    # block-diagonal additive bias: 0 within a head, -1e30 across heads
    head_id = jnp.arange(HD, dtype=jnp.int32) // dim_head
    mask_bias = jnp.where(head_id[:, None] == head_id[None, :],
                          0.0, -1e30).astype(jnp.float32)           # (HD, HD)
    # pos_emb weights, lane-tiled for the (H, W*C) layout:
    #   w1_flat[(j*9 + ky*3 + kx), w*Cout + o] = Wpe1[o, j, ky, kx]
    Cout, gsize, _, _ = params["Wpe1"].shape
    w1 = params["Wpe1"].transpose(1, 2, 3, 0).reshape(gsize * 9, Cout)
    w2 = params["Wpe2"].transpose(1, 2, 3, 0).reshape(9, Cout)
    w1_flat = jnp.tile(w1, (1, w_spatial))                          # (g*9, W*Cout)
    w2_flat = jnp.tile(w2, (1, w_spatial))                          # (9, W*Cout)
    return dict(w_qkv_t=w_qkv_t, w_proj_t=w_proj_t, b_proj=b_proj,
                rescale_row=rescale_row, mask_bias=mask_bias,
                w1_flat=w1_flat, w2_flat=w2_flat)


# --------------------------------------------------------------------------
# 1) Fused QKV projection: single lane-dense (M, 3*HD) output
# --------------------------------------------------------------------------
def _qkv_kernel(x_ref, w_ref, o_ref, *, use_bf16):
    xv = x_ref[...]
    wv = w_ref[...]
    if use_bf16:
        xv = xv.astype(jnp.bfloat16)
        wv = wv.astype(jnp.bfloat16)
    o_ref[...] = jnp.dot(xv, wv, preferred_element_type=jnp.float32)


def qkv_projection(x, w_qkv_t, use_bf16=False):
    M, K = x.shape
    N = w_qkv_t.shape[1]
    TM = _choose_tile_m(M, K, N)
    nbytes = 4 * (TM * K + K * N + TM * N)
    return pl.pallas_call(
        functools.partial(_qkv_kernel, use_bf16=use_bf16),
        grid=(M // TM,),
        in_specs=[pl.BlockSpec((TM, K), lambda i: (i, 0)),
                  pl.BlockSpec((K, N), lambda i: (0, 0))],
        out_specs=pl.BlockSpec((TM, N), lambda i: (i, 0)),
        out_shape=jax.ShapeDtypeStruct((M, N), jnp.float32),
        compiler_params=pltpu.CompilerParams(
            dimension_semantics=("parallel",),
            vmem_limit_bytes=_vmem_limit(nbytes)),
    )(x, w_qkv_t)


# --------------------------------------------------------------------------
# 2) pos_emb: fused grouped 3x3 conv + GELU + depthwise 3x3 conv in (H, W*C)
#    lane-packed layout.  Border-only halo zeroing, intermediate in VMEM.
# --------------------------------------------------------------------------
def _pos_emb_kernel(w1_ref, w2_ref, x_ref, o_ref, xpad_ref, ypad_ref, *,
                    H, W, Cout, gsize):
    WC = W * Cout
    WPC = (W + 2) * Cout
    zrow = jnp.zeros((1, WPC), jnp.float32)
    zcol = jnp.zeros((H, Cout), jnp.float32)

    # ---- conv #1 (groups=Cout, gsize input channels per group) -------------
    for j in range(gsize):
        xpad_ref[j, 0:1, :] = zrow
        xpad_ref[j, H + 1:H + 2, :] = zrow
        xpad_ref[j, 1:H + 1, 0:Cout] = zcol
        xpad_ref[j, 1:H + 1, (W + 1) * Cout:WPC] = zcol
        xpad_ref[j, 1:H + 1, Cout:(W + 1) * Cout] = x_ref[0, j]

    acc = jnp.zeros((H, WC), jnp.float32)
    for j in range(gsize):
        for ky in range(3):
            for kx in range(3):
                row = j * 9 + ky * 3 + kx
                acc = acc + (xpad_ref[j, ky:ky + H, kx * Cout:kx * Cout + WC]
                             * w1_ref[row:row + 1, :])

    # exact GELU (erf form), matching F.gelu default
    acc = 0.5 * acc * (1.0 + jax.lax.erf(acc * 0.7071067811865476))

    # ---- conv #2 (depthwise) ------------------------------------------------
    ypad_ref[0:1, :] = zrow
    ypad_ref[H + 1:H + 2, :] = zrow
    ypad_ref[1:H + 1, 0:Cout] = zcol
    ypad_ref[1:H + 1, (W + 1) * Cout:WPC] = zcol
    ypad_ref[1:H + 1, Cout:(W + 1) * Cout] = acc

    acc2 = jnp.zeros((H, WC), jnp.float32)
    for ky in range(3):
        for kx in range(3):
            row = ky * 3 + kx
            acc2 = acc2 + (ypad_ref[ky:ky + H, kx * Cout:kx * Cout + WC]
                           * w2_ref[row:row + 1, :])
    o_ref[0] = acc2


def pos_emb(v_grp, w1_flat, w2_flat, Cout):
    # v_grp: (b, gsize, H, W*Cout)  (group-j-major, channels packed into lanes)
    b, gsize, H, WC = v_grp.shape
    W = WC // Cout
    nbytes = 4 * ((gsize * 9 + 9) * WC + (gsize + 1) * H * WC
                  + (gsize + 1) * (H + 2) * (W + 2) * Cout)
    kern = functools.partial(_pos_emb_kernel, H=H, W=W, Cout=Cout, gsize=gsize)
    # TODO(synk): for large images on v7x (64 MiB VMEM), tile H with a 1-row
    # halo instead of keeping the full padded image in scratch.
    return pl.pallas_call(
        kern,
        grid=(b,),
        in_specs=[
            pl.BlockSpec((gsize * 9, WC), lambda i: (0, 0)),
            pl.BlockSpec((9, WC), lambda i: (0, 0)),
            pl.BlockSpec((1, gsize, H, WC), lambda i: (i, 0, 0, 0)),
        ],
        out_specs=pl.BlockSpec((1, H, WC), lambda i: (i, 0, 0)),
        out_shape=jax.ShapeDtypeStruct((b, H, WC), jnp.float32),
        scratch_shapes=[
            pltpu.VMEM((gsize, H + 2, (W + 2) * Cout), jnp.float32),
            pltpu.VMEM((H + 2, (W + 2) * Cout), jnp.float32),
        ],
        compiler_params=pltpu.CompilerParams(
            dimension_semantics=("parallel",),
            vmem_limit_bytes=_vmem_limit(nbytes)),
    )(w1_flat, w2_flat, v_grp)


# --------------------------------------------------------------------------
# 3) Attention (block-diagonal full-HD) + output projection + residual
# --------------------------------------------------------------------------
def _attn_proj_kernel(bias_ref, resc_ref, q_ref, k_ref, v_ref, r_ref,
                      w_ref, b_ref, o_ref, *, use_bf16):
    qa = q_ref[0]        # (n, HD)
    ka = k_ref[0]
    va = v_ref[0]
    # L2-normalize each column over n (== F.normalize(dim=-1) on the (d, n)
    # view, eps=1e-12), hoisted over all heads at once.
    qn = qa * jax.lax.rsqrt(
        jnp.maximum(jnp.sum(qa * qa, axis=0, keepdims=True), 1e-24))
    kn = ka * jax.lax.rsqrt(
        jnp.maximum(jnp.sum(ka * ka, axis=0, keepdims=True), 1e-24))
    kn = kn * resc_ref[...]           # fold per-head rescale into k columns
    if use_bf16:
        qn = qn.astype(jnp.bfloat16)
        kn = kn.astype(jnp.bfloat16)
    # Single full-HD score matrix: s[e, f] = sum_n k[n, e] * q[n, f]
    s = jax.lax.dot_general(kn, qn, (((0,), (0,)), ((), ())),
                            preferred_element_type=jnp.float32)
    s = s + bias_ref[...]             # block-diagonal mask (-1e30 cross-head)
    s = s - jnp.max(s, axis=-1, keepdims=True)
    p = jnp.exp(s)
    p = p * pl.reciprocal(jnp.sum(p, axis=-1, keepdims=True), approx=True)
    pv = p.astype(jnp.bfloat16) if use_bf16 else p
    vv = va.astype(jnp.bfloat16) if use_bf16 else va
    # out[n, e] = sum_f v[n, f] * p[e, f]
    attn_out = jax.lax.dot_general(vv, pv, (((1,), (1,)), ((), ())),
                                   preferred_element_type=jnp.float32)
    ao = attn_out.astype(jnp.bfloat16) if use_bf16 else attn_out
    wv = w_ref[...].astype(jnp.bfloat16) if use_bf16 else w_ref[...]
    o = jnp.dot(ao, wv, preferred_element_type=jnp.float32)
    o_ref[0] = o + b_ref[...] + r_ref[0]


def attention_proj(q, k, v, out_p, mask_bias, rescale_row, w_proj_t, b_proj,
                   use_bf16=False):
    # q, k, v: (b, n, HD); out_p: (b, n, c) residual; output: (b, n, c)
    b, n, HD = q.shape
    c = w_proj_t.shape[1]
    qkv_spec = pl.BlockSpec((1, n, HD), lambda i: (i, 0, 0))
    r_spec = pl.BlockSpec((1, n, c), lambda i: (i, 0, 0))
    nbytes = 4 * (HD * HD + HD + 3 * n * HD + 2 * n * c + HD * c + c)
    # NOTE(v7x): with b >= 2 the "parallel" batch grid feeds both TensorCores;
    # for b == 1 a head-group (or row-tile with proj accumulation) split would
    # be needed to occupy the second core.
    return pl.pallas_call(
        functools.partial(_attn_proj_kernel, use_bf16=use_bf16),
        grid=(b,),
        in_specs=[
            pl.BlockSpec((HD, HD), lambda i: (0, 0)),   # block-diagonal bias
            pl.BlockSpec((1, HD), lambda i: (0, 0)),    # rescale row
            qkv_spec, qkv_spec, qkv_spec,               # q, k, v
            r_spec,                                     # out_p residual
            pl.BlockSpec((HD, c), lambda i: (0, 0)),    # W_proj^T
            pl.BlockSpec((1, c), lambda i: (0, 0)),     # proj bias
        ],
        out_specs=r_spec,
        out_shape=jax.ShapeDtypeStruct((b, n, c), jnp.float32),
        compiler_params=pltpu.CompilerParams(
            dimension_semantics=("parallel",),
            vmem_limit_bytes=_vmem_limit(nbytes)),
    )(mask_bias, rescale_row, q, k, v, out_p, w_proj_t, b_proj)


# --------------------------------------------------------------------------
# Full MultiHeadAttention forward
# --------------------------------------------------------------------------
def multi_head_attention_forward(x, prep, heads, dim_head, use_bf16=False):
    b, h, w, c = x.shape
    n = h * w
    HD = heads * dim_head
    M = b * n
    gsize = prep["w1_flat"].shape[0] // 9     # HD // c (input channels / group)

    x2 = x.reshape(M, c)
    qkv = qkv_projection(x2, prep["w_qkv_t"], use_bf16)       # (M, 3*HD)
    q = qkv[:, :HD].reshape(b, n, HD)
    k = qkv[:, HD:2 * HD].reshape(b, n, HD)
    v = qkv[:, 2 * HD:].reshape(b, n, HD)

    # pos_emb path: pack channels group-major and (W, C) into the lane dim.
    v_img = v.reshape(b, h, w, HD)
    if gsize == 1:
        v_grp = v_img.reshape(b, 1, h, w * c)                 # free reshape
    else:
        v_grp = (v_img.reshape(b, h, w, c, gsize)
                 .transpose(0, 4, 1, 2, 3).reshape(b, gsize, h, w * c))
    out_p = pos_emb(v_grp, prep["w1_flat"], prep["w2_flat"], c)   # (b, h, w*c)
    out_p = out_p.reshape(b, n, c)

    # attention + proj + bias + residual, fused (out_attn never hits HBM)
    out = attention_proj(q, k, v, out_p, prep["mask_bias"], prep["rescale_row"],
                         prep["w_proj_t"], prep["b_proj"], use_bf16)
    return out.reshape(b, h, w, c)


# --------------------------------------------------------------------------
# Pure-JAX reference (for numerical check)
# --------------------------------------------------------------------------
def reference_forward(x, params, heads, dim_head):
    b, h, w, c = x.shape
    n = h * w
    HD = heads * dim_head
    hp = jax.lax.Precision.HIGHEST
    x2 = x.reshape(b, n, c)
    q_inp = jnp.einsum("bnc,dc->bnd", x2, params["Wq"], precision=hp)
    k_inp = jnp.einsum("bnc,dc->bnd", x2, params["Wk"], precision=hp)
    v_inp = jnp.einsum("bnc,dc->bnd", x2, params["Wv"], precision=hp)

    def r(t):
        return t.reshape(b, n, heads, dim_head).transpose(0, 2, 3, 1)

    q, k, v = r(q_inp), r(k_inp), r(v_inp)

    def l2n(t):
        norm = jnp.sqrt(jnp.sum(t * t, axis=-1, keepdims=True))
        return t / jnp.maximum(norm, 1e-12)

    q, k = l2n(q), l2n(k)
    attn = jnp.einsum("bhdn,bhen->bhde", k, q, precision=hp)
    attn = attn * params["rescale"][None, :, None, None]
    attn = jax.nn.softmax(attn, axis=-1)
    out = jnp.einsum("bhde,bhen->bhdn", attn, v, precision=hp)
    out = out.transpose(0, 3, 1, 2).reshape(b, n, HD)
    out_c = (
        jnp.einsum("bnk,ck->bnc", out, params["Wproj"], precision=hp)
        + params["bproj"]
    ).reshape(b, h, w, c)

    v_img = v_inp.reshape(b, h, w, HD).transpose(0, 3, 1, 2)
    y1 = jax.lax.conv_general_dilated(
        v_img, params["Wpe1"], (1, 1), "SAME", feature_group_count=c, precision=hp
    )
    y1 = 0.5 * y1 * (1.0 + jax.lax.erf(y1 / jnp.sqrt(2.0)))
    y2 = jax.lax.conv_general_dilated(
        y1, params["Wpe2"], (1, 1), "SAME", feature_group_count=c, precision=hp
    )
    out_p = y2.transpose(0, 2, 3, 1)
    return out_c + out_p


# --------------------------------------------------------------------------
if __name__ == "__main__":
    # small shapes: dim == heads*dim_head so pos_emb's groups=dim is depthwise
    dim, dim_head, heads = 32, 8, 4
    b, h, w = 2, 8, 8
    HD = heads * dim_head

    key = jax.random.PRNGKey(0)
    ks = jax.random.split(key, 8)
    params = {
        "Wq": 0.1 * jax.random.normal(ks[0], (HD, dim), jnp.float32),
        "Wk": 0.1 * jax.random.normal(ks[1], (HD, dim), jnp.float32),
        "Wv": 0.1 * jax.random.normal(ks[2], (HD, dim), jnp.float32),
        "rescale": jnp.ones((heads,), jnp.float32),
        "Wproj": 0.1 * jax.random.normal(ks[3], (dim, HD), jnp.float32),
        "bproj": 0.1 * jax.random.normal(ks[4], (dim,), jnp.float32),
        "Wpe1": 0.1 * jax.random.normal(ks[5], (dim, HD // dim, 3, 3), jnp.float32),
        "Wpe2": 0.1 * jax.random.normal(ks[6], (dim, 1, 3, 3), jnp.float32),
    }
    x = jax.random.normal(ks[7], (b, h, w, dim), jnp.float32)

    # parameter prep hoisted out of the per-forward path (done once)
    prep = prepare_params(params, heads, dim_head, w)

    # use_bf16=True is the v6e/v7x MXU fast path (accuracy-affecting, gated)
    fwd = jax.jit(functools.partial(
        multi_head_attention_forward, heads=heads, dim_head=dim_head,
        use_bf16=False))
    out = jax.block_until_ready(fwd(x, prep))

    ref = jax.block_until_ready(reference_forward(x, params, heads, dim_head))
    max_err = float(jnp.max(jnp.abs(out - ref)))
    assert out.shape == (b, h, w, dim)
    assert max_err < 1e-2, f"max abs error too large: {max_err}"

    print("KERNEL_OK")
</pallas_src>

<mosaic_0001>
module attributes {stable_mosaic.version = 11 : i64} {
  func.func @_pos_emb_kernel(%arg0: i32, %arg1: memref<9x256xf32, #tpu.memory_space<vmem>>, %arg2: memref<9x256xf32, #tpu.memory_space<vmem>>, %arg3: memref<1x1x8x256xf32, #tpu.memory_space<vmem>>, %arg4: memref<1x8x256xf32, #tpu.memory_space<vmem>>, %arg5: memref<1x10x320xf32, #tpu.memory_space<vmem>>, %arg6: memref<10x320xf32, #tpu.memory_space<vmem>>) attributes {dimension_semantics = [#tpu.dimension_semantics<parallel>], iteration_bounds = array<i64: 2>, scalar_prefetch = 0 : i64, scratch_operands = 2 : i64, tpu.core_type = #tpu.core_type<tc>, window_params = [{pipeline_mode = #tpu.pipeline_mode<synchronous>, transform_indices = @transform_0, window_bounds = array<i64: 9, 256>}, {pipeline_mode = #tpu.pipeline_mode<synchronous>, transform_indices = @transform_1, window_bounds = array<i64: 9, 256>}, {transform_indices = @transform_2, window_bounds = array<i64: 1, 1, 8, 256>}, {transform_indices = @transform_3, window_bounds = array<i64: 1, 8, 256>}]} {
    %cst = arith.constant 0.000000e+00 : f32
    %0 = vector.broadcast %cst : f32 to vector<1x320xf32>
    %cst_0 = arith.constant 0.000000e+00 : f32
    %1 = vector.broadcast %cst_0 : f32 to vector<8x32xf32>
    %c0 = arith.constant 0 : index
    %c0_1 = arith.constant 0 : index
    %c0_2 = arith.constant 0 : index
    %2 = vector.load %arg5[%c0, %c0_1, %c0_2] : memref<1x10x320xf32, #tpu.memory_space<vmem>>, vector<1x1x320xf32>
    %3 = vector.shape_cast %2 : vector<1x1x320xf32> to vector<1x320xf32>
    %4 = vector.shape_cast %0 : vector<1x320xf32> to vector<1x1x320xf32>
    tpu.vector_store %arg5[%c0, %c0_1, %c0_2], %4 {strides = array<i32>} : memref<1x10x320xf32, #tpu.memory_space<vmem>>, vector<1x1x320xf32>,
    %c0_3 = arith.constant 0 : index
    %c9 = arith.constant 9 : index
    %c0_4 = arith.constant 0 : index
    %5 = vector.load %arg5[%c0_3, %c9, %c0_4] : memref<1x10x320xf32, #tpu.memory_space<vmem>>, vector<1x1x320xf32>
    %6 = vector.shape_cast %5 : vector<1x1x320xf32> to vector<1x320xf32>
    %7 = vector.shape_cast %0 : vector<1x320xf32> to vector<1x1x320xf32>
    tpu.vector_store %arg5[%c0_3, %c9, %c0_4], %7 {strides = array<i32>} : memref<1x10x320xf32, #tpu.memory_space<vmem>>, vector<1x1x320xf32>,
    %c0_5 = arith.constant 0 : index
    %c1 = arith.constant 1 : index
    %c0_6 = arith.constant 0 : index
    %8 = vector.load %arg5[%c0_5, %c1, %c0_6] : memref<1x10x320xf32, #tpu.memory_space<vmem>>, vector<1x8x32xf32>
    %9 = vector.shape_cast %8 : vector<1x8x32xf32> to vector<8x32xf32>
    %10 = vector.shape_cast %1 : vector<8x32xf32> to vector<1x8x32xf32>
    tpu.vector_store %arg5[%c0_5, %c1, %c0_6], %10 {strides = array<i32>} : memref<1x10x320xf32, #tpu.memory_space<vmem>>, vector<1x8x32xf32>,
    %c0_7 = arith.constant 0 : index
    %c1_8 = arith.constant 1 : index
    %c288 = arith.constant 288 : index
    %11 = vector.load %arg5[%c0_7, %c1_8, %c288] : memref<1x10x320xf32, #tpu.memory_space<vmem>>, vector<1x8x32xf32>
    %12 = vector.shape_cast %11 : vector<1x8x32xf32> to vector<8x32xf32>
    %13 = vector.shape_cast %1 : vector<8x32xf32> to vector<1x8x32xf32>
    tpu.vector_store %arg5[%c0_7, %c1_8, %c288], %13 {strides = array<i32>} : memref<1x10x320xf32, #tpu.memory_space<vmem>>, vector<1x8x32xf32>,
    %c0_9 = arith.constant 0 : index
    %c0_10 = arith.constant 0 : index
    %c0_11 = arith.constant 0 : index
    %c0_12 = arith.constant 0 : index
    %14 = vector.load %arg3[%c0_9, %c0_10, %c0_11, %c0_12] : memref<1x1x8x256xf32, #tpu.memory_space<vmem>>, vector<1x1x8x256xf32>
    %15 = vector.shape_cast %14 : vector<1x1x8x256xf32> to vector<8x256xf32>
    %c0_13 = arith.constant 0 : index
    %c1_14 = arith.constant 1 : index
    %c32 = arith.constant 32 : index
    %16 = vector.load %arg5[%c0_13, %c1_14, %c32] : memref<1x10x320xf32, #tpu.memory_space<vmem>>, vector<1x8x256xf32>
    %17 = vector.shape_cast %16 : vector<1x8x256xf32> to vector<8x256xf32>
    %18 = vector.shape_cast %15 : vector<8x256xf32> to vector<1x8x256xf32>
    tpu.vector_store %arg5[%c0_13, %c1_14, %c32], %18 {strides = array<i32>} : memref<1x10x320xf32, #tpu.memory_space<vmem>>, vector<1x8x256xf32>,
    %cst_15 = arith.constant 0.000000e+00 : f32
    %19 = vector.broadcast %cst_15 : f32 to vector<8x256xf32>
    %c0_16 = arith.constant 0 : index
    %c0_17 = arith.constant 0 : index
    %c0_18 = arith.constant 0 : index
    %20 = vector.load %arg5[%c0_16, %c0_17, %c0_18] : memref<1x10x320xf32, #tpu.memory_space<vmem>>, vector<1x8x256xf32>
    %21 = vector.shape_cast %20 : vector<1x8x256xf32> to vector<8x256xf32>
    %c0_19 = arith.constant 0 : index
    %c0_20 = arith.constant 0 : index
    %22 = vector.load %arg1[%c0_19, %c0_20] : memref<9x256xf32, #tpu.memory_space<vmem>>, vector<1x256xf32>
    %23 = vector.broadcast %22 : vector<1x256xf32> to vector<8x256xf32>
    %24 = arith.mulf %21, %23 : vector<8x256xf32>
    %25 = arith.addf %19, %24 : vector<8x256xf32>
    %c0_21 = arith.constant 0 : index
    %c0_22 = arith.constant 0 : index
    %c32_23 = arith.constant 32 : index
    %26 = vector.load %arg5[%c0_21, %c0_22, %c32_23] : memref<1x10x320xf32, #tpu.memory_space<vmem>>, vector<1x8x256xf32>
    %27 = vector.shape_cast %26 : vector<1x8x256xf32> to vector<8x256xf32>
    %c1_24 = arith.constant 1 : index
    %c0_25 = arith.constant 0 : index
    %28 = vector.load %arg1[%c1_24, %c0_25] : memref<9x256xf32, #tpu.memory_space<vmem>>, vector<1x256xf32>
    %29 = vector.broadcast %28 : vector<1x256xf32> to vector<8x256xf32>
    %30 = arith.mulf %27, %29 : vector<8x256xf32>
    %31 = arith.addf %25, %30 : vector<8x256xf32>
    %c0_26 = arith.constant 0 : index
    %c0_27 = arith.constant 0 : index
    %c64 = arith.constant 64 : index
    %32 = vector.load %arg5[%c0_26, %c0_27, %c64] : memref<1x10x320xf32, #tpu.memory_space<vmem>>, vector<1x8x256xf32>
    %33 = vector.shape_cast %32 : vector<1x8x256xf32> to vector<8x256xf32>
    %c2 = arith.constant 2 : index
    %c0_28 = arith.constant 0 : index
    %34 = vector.load %arg1[%c2, %c0_28] : memref<9x256xf32, #tpu.memory_space<vmem>>, vector<1x256xf32>
    %35 = vector.broadcast %34 : vector<1x256xf32> to vector<8x256xf32>
    %36 = arith.mulf %33, %35 : vector<8x256xf32>
    %37 = arith.addf %31, %36 : vector<8x256xf32>
    %c0_29 = arith.constant 0 : index
    %c1_30 = arith.constant 1 : index
    %c0_31 = arith.constant 0 : index
    %38 = vector.load %arg5[%c0_29, %c1_30, %c0_31] : memref<1x10x320xf32, #tpu.memory_space<vmem>>, vector<1x8x256xf32>
    %39 = vector.shape_cast %38 : vector<1x8x256xf32> to vector<8x256xf32>
    %c3 = arith.constant 3 : index
    %c0_32 = arith.constant 0 : index
    %40 = vector.load %arg1[%c3, %c0_32] : memref<9x256xf32, #tpu.memory_space<vmem>>, vector<1x256xf32>
    %41 = vector.broadcast %40 : vector<1x256xf32> to vector<8x256xf32>
    %42 = arith.mulf %39, %41 : vector<8x256xf32>
    %43 = arith.addf %37, %42 : vector<8x256xf32>
    %c0_33 = arith.constant 0 : index
    %c1_34 = arith.constant 1 : index
    %c32_35 = arith.constant 32 : index
    %44 = vector.load %arg5[%c0_33, %c1_34, %c32_35] : memref<1x10x320xf32, #tpu.memory_space<vmem>>, vector<1x8x256xf32>
    %45 = vector.shape_cast %44 : vector<1x8x256xf32> to vector<8x256xf32>
    %c4 = arith.constant 4 : index
    %c0_36 = arith.constant 0 : index
    %46 = vector.load %arg1[%c4, %c0_36] : memref<9x256xf32, #tpu.memory_space<vmem>>, vector<1x256xf32>
    %47 = vector.broadcast %46 : vector<1x256xf32> to vector<8x256xf32>
    %48 = arith.mulf %45, %47 : vector<8x256xf32>
    %49 = arith.addf %43, %48 : vector<8x256xf32>
    %c0_37 = arith.constant 0 : index
    %c1_38 = arith.constant 1 : index
    %c64_39 = arith.constant 64 : index
    %50 = vector.load %arg5[%c0_37, %c1_38, %c64_39] : memref<1x10x320xf32, #tpu.memory_space<vmem>>, vector<1x8x256xf32>
    %51 = vector.shape_cast %50 : vector<1x8x256xf32> to vector<8x256xf32>
    %c5 = arith.constant 5 : index
    %c0_40 = arith.constant 0 : index
    %52 = vector.load %arg1[%c5, %c0_40] : memref<9x256xf32, #tpu.memory_space<vmem>>, vector<1x256xf32>
    %53 = vector.broadcast %52 : vector<1x256xf32> to vector<8x256xf32>
    %54 = arith.mulf %51, %53 : vector<8x256xf32>
    %55 = arith.addf %49, %54 : vector<8x256xf32>
    %c0_41 = arith.constant 0 : index
    %c2_42 = arith.constant 2 : index
    %c0_43 = arith.constant 0 : index
    %56 = vector.load %arg5[%c0_41, %c2_42, %c0_43] : memref<1x10x320xf32, #tpu.memory_space<vmem>>, vector<1x8x256xf32>
    %57 = vector.shape_cast %56 : vector<1x8x256xf32> to vector<8x256xf32>
    %c6 = arith.constant 6 : index
    %c0_44 = arith.constant 0 : index
    %58 = vector.load %arg1[%c6, %c0_44] : memref<9x256xf32, #tpu.memory_space<vmem>>, vector<1x256xf32>
    %59 = vector.broadcast %58 : vector<1x256xf32> to vector<8x256xf32>
    %60 = arith.mulf %57, %59 : vector<8x256xf32>
    %61 = arith.addf %55, %60 : vector<8x256xf32>
    %c0_45 = arith.constant 0 : index
    %c2_46 = arith.constant 2 : index
    %c32_47 = arith.constant 32 : index
    %62 = vector.load %arg5[%c0_45, %c2_46, %c32_47] : memref<1x10x320xf32, #tpu.memory_space<vmem>>, vector<1x8x256xf32>
    %63 = vector.shape_cast %62 : vector<1x8x256xf32> to vector<8x256xf32>
    %c7 = arith.constant 7 : index
    %c0_48 = arith.constant 0 : index
    %64 = vector.load %arg1[%c7, %c0_48] : memref<9x256xf32, #tpu.memory_space<vmem>>, vector<1x256xf32>
    %65 = vector.broadcast %64 : vector<1x256xf32> to vector<8x256xf32>
    %66 = arith.mulf %63, %65 : vector<8x256xf32>
    %67 = arith.addf %61, %66 : vector<8x256xf32>
    %c0_49 = arith.constant 0 : index
    %c2_50 = arith.constant 2 : index
    %c64_51 = arith.constant 64 : index
    %68 = vector.load %arg5[%c0_49, %c2_50, %c64_51] : memref<1x10x320xf32, #tpu.memory_space<vmem>>, vector<1x8x256xf32>
    %69 = vector.shape_cast %68 : vector<1x8x256xf32> to vector<8x256xf32>
    %c8 = arith.constant 8 : index
    %c0_52 = arith.constant 0 : index
    %70 = vector.load %arg1[%c8, %c0_52] : memref<9x256xf32, #tpu.memory_space<vmem>>, vector<1x256xf32>
    %71 = vector.broadcast %70 : vector<1x256xf32> to vector<8x256xf32>
    %72 = arith.mulf %69, %71 : vector<8x256xf32>
    %73 = arith.addf %67, %72 : vector<8x256xf32>
    %cst_53 = arith.constant 5.000000e-01 : f32
    %74 = vector.broadcast %cst_53 : f32 to vector<8x256xf32>
    %75 = arith.mulf %74, %73 : vector<8x256xf32>
    %cst_54 = arith.constant 0.707106769 : f32
    %76 = vector.broadcast %cst_54 : f32 to vector<8x256xf32>
    %77 = arith.mulf %73, %76 : vector<8x256xf32>
    %78 = math.erf %77 : vector<8x256xf32>
    %cst_55 = arith.constant 1.000000e+00 : f32
    %79 = vector.broadcast %cst_55 : f32 to vector<8x256xf32>
    %80 = arith.addf %79, %78 : vector<8x256xf32>
    %81 = arith.mulf %75, %80 : vector<8x256xf32>
    %c0_56 = arith.constant 0 : index
    %c0_57 = arith.constant 0 : index
    %82 = vector.load %arg6[%c0_56, %c0_57] : memref<10x320xf32, #tpu.memory_space<vmem>>, vector<1x320xf32>
    tpu.vector_store %arg6[%c0_56, %c0_57], %0 {strides = array<i32>} : memref<10x320xf32, #tpu.memory_space<vmem>>, vector<1x320xf32>,
    %c9_58 = arith.constant 9 : index
    %c0_59 = arith.constant 0 : index
    %83 = vector.load %arg6[%c9_58, %c0_59] : memref<10x320xf32, #tpu.memory_space<vmem>>, vector<1x320xf32>
    tpu.vector_store %arg6[%c9_58, %c0_59], %0 {strides = array<i32>} : memref<10x320xf32, #tpu.memory_space<vmem>>, vector<1x320xf32>,
    %c1_60 = arith.constant 1 : index
    %c0_61 = arith.constant 0 : index
    %84 = vector.load %arg6[%c1_60, %c0_61] : memref<10x320xf32, #tpu.memory_space<vmem>>, vector<8x32xf32>
    tpu.vector_store %arg6[%c1_60, %c0_61], %1 {strides = array<i32>} : memref<10x320xf32, #tpu.memory_space<vmem>>, vector<8x32xf32>,
    %c1_62 = arith.constant 1 : index
    %c288_63 = arith.constant 288 : index
    %85 = vector.load %arg6[%c1_62, %c288_63] : memref<10x320xf32, #tpu.memory_space<vmem>>, vector<8x32xf32>
    tpu.vector_store %arg6[%c1_62, %c288_63], %1 {strides = array<i32>} : memref<10x320xf32, #tpu.memory_space<vmem>>, vector<8x32xf32>,
    %c1_64 = arith.constant 1 : index
    %c32_65 = arith.constant 32 : index
    %86 = vector.load %arg6[%c1_64, %c32_65] : memref<10x320xf32, #tpu.memory_space<vmem>>, vector<8x256xf32>
    tpu.vector_store %arg6[%c1_64, %c32_65], %81 {strides = array<i32>} : memref<10x320xf32, #tpu.memory_space<vmem>>, vector<8x256xf32>,
    %cst_66 = arith.constant 0.000000e+00 : f32
    %87 = vector.broadcast %cst_66 : f32 to vector<8x256xf32>
    %c0_67 = arith.constant 0 : index
    %c0_68 = arith.constant 0 : index
    %88 = vector.load %arg6[%c0_67, %c0_68] : memref<10x320xf32, #tpu.memory_space<vmem>>, vector<8x256xf32>
    %c0_69 = arith.constant 0 : index
    %c0_70 = arith.constant 0 : index
    %89 = vector.load %arg2[%c0_69, %c0_70] : memref<9x256xf32, #tpu.memory_space<vmem>>, vector<1x256xf32>
    %90 = vector.broadcast %89 : vector<1x256xf32> to vector<8x256xf32>
    %91 = arith.mulf %88, %90 : vector<8x256xf32>
    %92 = arith.addf %87, %91 : vector<8x256xf32>
    %c0_71 = arith.constant 0 : index
    %c32_72 = arith.constant 32 : index
    %93 = vector.load %arg6[%c0_71, %c32_72] : memref<10x320xf32, #tpu.memory_space<vmem>>, vector<8x256xf32>
    %c1_73 = arith.constant 1 : index
    %c0_74 = arith.constant 0 : index
    %94 = vector.load %arg2[%c1_73, %c0_74] : memref<9x256xf32, #tpu.memory_space<vmem>>, vector<1x256xf32>
    %95 = vector.broadcast %94 : vector<1x256xf32> to vector<8x256xf32>
    %96 = arith.mulf %93, %95 : vector<8x256xf32>
    %97 = arith.addf %92, %96 : vector<8x256xf32>
    %c0_75 = arith.constant 0 : index
    %c64_76 = arith.constant 64 : index
    %98 = vector.load %arg6[%c0_75, %c64_76] : memref<10x320xf32, #tpu.memory_space<vmem>>, vector<8x256xf32>
    %c2_77 = arith.constant 2 : index
    %c0_78 = arith.constant 0 : index
    %99 = vector.load %arg2[%c2_77, %c0_78] : memref<9x256xf32, #tpu.memory_space<vmem>>, vector<1x256xf32>
    %100 = vector.broadcast %99 : vector<1x256xf32> to vector<8x256xf32>
    %101 = arith.mulf %98, %100 : vector<8x256xf32>
    %102 = arith.addf %97, %101 : vector<8x256xf32>
    %c1_79 = arith.constant 1 : index
    %c0_80 = arith.constant 0 : index
    %103 = vector.load %arg6[%c1_79, %c0_80] : memref<10x320xf32, #tpu.memory_space<vmem>>, vector<8x256xf32>
    %c3_81 = arith.constant 3 : index
    %c0_82 = arith.constant 0 : index
    %104 = vector.load %arg2[%c3_81, %c0_82] : memref<9x256xf32, #tpu.memory_space<vmem>>, vector<1x256xf32>
    %105 = vector.broadcast %104 : vector<1x256xf32> to vector<8x256xf32>
    %106 = arith.mulf %103, %105 : vector<8x256xf32>
    %107 = arith.addf %102, %106 : vector<8x256xf32>
    %c1_83 = arith.constant 1 : index
    %c32_84 = arith.constant 32 : index
    %108 = vector.load %arg6[%c1_83, %c32_84] : memref<10x320xf32, #tpu.memory_space<vmem>>, vector<8x256xf32>
    %c4_85 = arith.constant 4 : index
    %c0_86 = arith.constant 0 : index
    %109 = vector.load %arg2[%c4_85, %c0_86] : memref<9x256xf32, #tpu.memory_space<vmem>>, vector<1x256xf32>
    %110 = vector.broadcast %109 : vector<1x256xf32> to vector<8x256xf32>
    %111 = arith.mulf %108, %110 : vector<8x256xf32>
    %112 = arith.addf %107, %111 : vector<8x256xf32>
    %c1_87 = arith.constant 1 : index
    %c64_88 = arith.constant 64 : index
    %113 = vector.load %arg6[%c1_87, %c64_88] : memref<10x320xf32, #tpu.memory_space<vmem>>, vector<8x256xf32>
    %c5_89 = arith.constant 5 : index
    %c0_90 = arith.constant 0 : index
    %114 = vector.load %arg2[%c5_89, %c0_90] : memref<9x256xf32, #tpu.memory_space<vmem>>, vector<1x256xf32>
    %115 = vector.broadcast %114 : vector<1x256xf32> to vector<8x256xf32>
    %116 = arith.mulf %113, %115 : vector<8x256xf32>
    %117 = arith.addf %112, %116 : vector<8x256xf32>
    %c2_91 = arith.constant 2 : index
    %c0_92 = arith.constant 0 : index
    %118 = vector.load %arg6[%c2_91, %c0_92] : memref<10x320xf32, #tpu.memory_space<vmem>>, vector<8x256xf32>
    %c6_93 = arith.constant 6 : index
    %c0_94 = arith.constant 0 : index
    %119 = vector.load %arg2[%c6_93, %c0_94] : memref<9x256xf32, #tpu.memory_space<vmem>>, vector<1x256xf32>
    %120 = vector.broadcast %119 : vector<1x256xf32> to vector<8x256xf32>
    %121 = arith.mulf %118, %120 : vector<8x256xf32>
    %122 = arith.addf %117, %121 : vector<8x256xf32>
    %c2_95 = arith.constant 2 : index
    %c32_96 = arith.constant 32 : index
    %123 = vector.load %arg6[%c2_95, %c32_96] : memref<10x320xf32, #tpu.memory_space<vmem>>, vector<8x256xf32>
    %c7_97 = arith.constant 7 : index
    %c0_98 = arith.constant 0 : index
    %124 = vector.load %arg2[%c7_97, %c0_98] : memref<9x256xf32, #tpu.memory_space<vmem>>, vector<1x256xf32>
    %125 = vector.broadcast %124 : vector<1x256xf32> to vector<8x256xf32>
    %126 = arith.mulf %123, %125 : vector<8x256xf32>
    %127 = arith.addf %122, %126 : vector<8x256xf32>
    %c2_99 = arith.constant 2 : index
    %c64_100 = arith.constant 64 : index
    %128 = vector.load %arg6[%c2_99, %c64_100] : memref<10x320xf32, #tpu.memory_space<vmem>>, vector<8x256xf32>
    %c8_101 = arith.constant 8 : index
    %c0_102 = arith.constant 0 : index
    %129 = vector.load %arg2[%c8_101, %c0_102] : memref<9x256xf32, #tpu.memory_space<vmem>>, vector<1x256xf32>
    %130 = vector.broadcast %129 : vector<1x256xf32> to vector<8x256xf32>
    %131 = arith.mulf %128, %130 : vector<8x256xf32>
    %132 = arith.addf %127, %131 : vector<8x256xf32>
    %c0_103 = arith.constant 0 : index
    %c0_104 = arith.constant 0 : index
    %c0_105 = arith.constant 0 : index
    %133 = vector.load %arg4[%c0_103, %c0_104, %c0_105] : memref<1x8x256xf32, #tpu.memory_space<vmem>>, vector<1x8x256xf32>
    %134 = vector.shape_cast %133 : vector<1x8x256xf32> to vector<8x256xf32>
    %135 = vector.shape_cast %132 : vector<8x256xf32> to vector<1x8x256xf32>
    tpu.vector_store %arg4[%c0_103, %c0_104, %c0_105], %135 {strides = array<i32>} : memref<1x8x256xf32, #tpu.memory_space<vmem>>, vector<1x8x256xf32>,
    return
  }
  func.func @transform_0(%arg0: i32) -> (i32, i32) {
    %c0_i32 = arith.constant 0 : i32
    %c0_i32_0 = arith.constant 0 : i32
    %c0_i32_1 = arith.constant 0 : i32
    return %c0_i32, %c0_i32_0 : i32, i32
  }
  func.func @transform_1(%arg0: i32) -> (i32, i32) {
    %c0_i32 = arith.constant 0 : i32
    %c0_i32_0 = arith.constant 0 : i32
    %c0_i32_1 = arith.constant 0 : i32
    return %c0_i32, %c0_i32_0 : i32, i32
  }
  func.func @transform_2(%arg0: i32) -> (i32, i32, i32, i32) {
    %c0_i32 = arith.constant 0 : i32
    %c0_i32_0 = arith.constant 0 : i32
    %c0_i32_1 = arith.constant 0 : i32
    %c0_i32_2 = arith.constant 0 : i32
    return %arg0, %c0_i32, %c0_i32_0, %c0_i32_1 : i32, i32, i32, i32
  }
  func.func @transform_3(%arg0: i32) -> (i32, i32, i32) {
    %c0_i32 = arith.constant 0 : i32
    %c0_i32_0 = arith.constant 0 : i32
    %c0_i32_1 = arith.constant 0 : i32
    return %arg0, %c0_i32, %c0_i32_0 : i32, i32, i32
  }
}

module attributes {stable_mosaic.version = 11 : i64} {
  func.func @_qkv_kernel(%arg0: i32, %arg1: memref<64x32xf32, #tpu.memory_space<vmem>>, %arg2: memref<32x96xf32, #tpu.memory_space<vmem>>, %arg3: memref<64x96xf32, #tpu.memory_space<vmem>>) attributes {dimension_semantics = [#tpu.dimension_semantics<parallel>], iteration_bounds = array<i64: 2>, scalar_prefetch = 0 : i64, scratch_operands = 0 : i64, tpu.core_type = #tpu.core_type<tc>, window_params = [{transform_indices = @transform_0, window_bounds = array<i64: 64, 32>}, {pipeline_mode = #tpu.pipeline_mode<synchronous>, transform_indices = @transform_1, window_bounds = array<i64: 32, 96>}, {transform_indices = @transform_2, window_bounds = array<i64: 64, 96>}]} {
    %c0 = arith.constant 0 : index
    %c0_0 = arith.constant 0 : index
    %0 = vector.load %arg1[%c0, %c0_0] : memref<64x32xf32, #tpu.memory_space<vmem>>, vector<64x32xf32>
    %c0_1 = arith.constant 0 : index
    %c0_2 = arith.constant 0 : index
    %1 = vector.load %arg2[%c0_1, %c0_2] : memref<32x96xf32, #tpu.memory_space<vmem>>, vector<32x96xf32>
    %cst = arith.constant dense<0.000000e+00> : vector<64x96xf32>
    %2 = tpu.matmul %0, %1, %cst {dimension_numbers = #tpu.dot_dimension_numbers<[1], [0], [0], [1], [0, 0, 1, 1], [], []>} : vector<64x32xf32>, vector<32x96xf32>, vector<64x96xf32> -> vector<64x96xf32>
    %c0_3 = arith.constant 0 : index
    %c0_4 = arith.constant 0 : index
    %3 = vector.load %arg3[%c0_3, %c0_4] : memref<64x96xf32, #tpu.memory_space<vmem>>, vector<64x96xf32>
    tpu.vector_store %arg3[%c0_3, %c0_4], %2 {strides = array<i32>} : memref<64x96xf32, #tpu.memory_space<vmem>>, vector<64x96xf32>,
    return
  }
  func.func @transform_0(%arg0: i32) -> (i32, i32) {
    %c0_i32 = arith.constant 0 : i32
    %c0_i32_0 = arith.constant 0 : i32
    return %arg0, %c0_i32 : i32, i32
  }
  func.func @transform_1(%arg0: i32) -> (i32, i32) {
    %c0_i32 = arith.constant 0 : i32
    %c0_i32_0 = arith.constant 0 : i32
    %c0_i32_1 = arith.constant 0 : i32
    return %c0_i32, %c0_i32_0 : i32, i32
  }
  func.func @transform_2(%arg0: i32) -> (i32, i32) {
    %c0_i32 = arith.constant 0 : i32
    %c0_i32_0 = arith.constant 0 : i32
    return %arg0, %c0_i32 : i32, i32
  }
}

module attributes {stable_mosaic.version = 11 : i64} {
  func.func @_attn_proj_kernel(%arg0: i32, %arg1: memref<32x32xf32, #tpu.memory_space<vmem>>, %arg2: memref<1x32xf32, #tpu.memory_space<vmem>>, %arg3: memref<1x64x32xf32, #tpu.memory_space<vmem>>, %arg4: memref<1x64x32xf32, #tpu.memory_space<vmem>>, %arg5: memref<1x64x32xf32, #tpu.memory_space<vmem>>, %arg6: memref<1x64x32xf32, #tpu.memory_space<vmem>>, %arg7: memref<32x32xf32, #tpu.memory_space<vmem>>, %arg8: memref<1x32xf32, #tpu.memory_space<vmem>>, %arg9: memref<1x64x32xf32, #tpu.memory_space<vmem>>) attributes {dimension_semantics = [#tpu.dimension_semantics<parallel>], iteration_bounds = array<i64: 2>, scalar_prefetch = 0 : i64, scratch_operands = 0 : i64, tpu.core_type = #tpu.core_type<tc>, window_params = [{pipeline_mode = #tpu.pipeline_mode<synchronous>, transform_indices = @transform_0, window_bounds = array<i64: 32, 32>}, {pipeline_mode = #tpu.pipeline_mode<synchronous>, transform_indices = @transform_1, window_bounds = array<i64: 1, 32>}, {transform_indices = @transform_2, window_bounds = array<i64: 1, 64, 32>}, {transform_indices = @transform_3, window_bounds = array<i64: 1, 64, 32>}, {transform_indices = @transform_4, window_bounds = array<i64: 1, 64, 32>}, {transform_indices = @transform_5, window_bounds = array<i64: 1, 64, 32>}, {pipeline_mode = #tpu.pipeline_mode<synchronous>, transform_indices = @transform_6, window_bounds = array<i64: 32, 32>}, {pipeline_mode = #tpu.pipeline_mode<synchronous>, transform_indices = @transform_7, window_bounds = array<i64: 1, 32>}, {transform_indices = @transform_8, window_bounds = array<i64: 1, 64, 32>}]} {
    %c0 = arith.constant 0 : index
    %c0_0 = arith.constant 0 : index
    %c0_1 = arith.constant 0 : index
    %0 = vector.load %arg3[%c0, %c0_0, %c0_1] : memref<1x64x32xf32, #tpu.memory_space<vmem>>, vector<1x64x32xf32>
    %1 = vector.shape_cast %0 : vector<1x64x32xf32> to vector<64x32xf32>
    %c0_2 = arith.constant 0 : index
    %c0_3 = arith.constant 0 : index
    %c0_4 = arith.constant 0 : index
    %2 = vector.load %arg4[%c0_2, %c0_3, %c0_4] : memref<1x64x32xf32, #tpu.memory_space<vmem>>, vector<1x64x32xf32>
    %3 = vector.shape_cast %2 : vector<1x64x32xf32> to vector<64x32xf32>
    %c0_5 = arith.constant 0 : index
    %c0_6 = arith.constant 0 : index
    %c0_7 = arith.constant 0 : index
    %4 = vector.load %arg5[%c0_5, %c0_6, %c0_7] : memref<1x64x32xf32, #tpu.memory_space<vmem>>, vector<1x64x32xf32>
    %5 = vector.shape_cast %4 : vector<1x64x32xf32> to vector<64x32xf32>
    %6 = arith.mulf %1, %1 : vector<64x32xf32>
    %cst = arith.constant dense<0.000000e+00> : vector<32xf32>
    %7 = vector.multi_reduction <add>, %6, %cst [0] : vector<64x32xf32> to vector<32xf32>
    %8 = vector.shape_cast %7 : vector<32xf32> to vector<1x32xf32>
    %cst_8 = arith.constant 1.000000e-24 : f32
    %9 = vector.broadcast %cst_8 : f32 to vector<1x32xf32>
    %10 = arith.maximumf %8, %9 : vector<1x32xf32>
    %11 = math.rsqrt %10 : vector<1x32xf32>
    %12 = vector.broadcast %11 : vector<1x32xf32> to vector<64x32xf32>
    %13 = arith.mulf %1, %12 : vector<64x32xf32>
    %14 = arith.mulf %3, %3 : vector<64x32xf32>
    %cst_9 = arith.constant dense<0.000000e+00> : vector<32xf32>
    %15 = vector.multi_reduction <add>, %14, %cst_9 [0] : vector<64x32xf32> to vector<32xf32>
    %16 = vector.shape_cast %15 : vector<32xf32> to vector<1x32xf32>
    %cst_10 = arith.constant 1.000000e-24 : f32
    %17 = vector.broadcast %cst_10 : f32 to vector<1x32xf32>
    %18 = arith.maximumf %16, %17 : vector<1x32xf32>
    %19 = math.rsqrt %18 : vector<1x32xf32>
    %20 = vector.broadcast %19 : vector<1x32xf32> to vector<64x32xf32>
    %21 = arith.mulf %3, %20 : vector<64x32xf32>
    %c0_11 = arith.constant 0 : index
    %c0_12 = arith.constant 0 : index
    %22 = vector.load %arg2[%c0_11, %c0_12] : memref<1x32xf32, #tpu.memory_space<vmem>>, vector<1x32xf32>
    %23 = vector.broadcast %22 : vector<1x32xf32> to vector<64x32xf32>
    %24 = arith.mulf %21, %23 : vector<64x32xf32>
    %cst_13 = arith.constant dense<0.000000e+00> : vector<32x32xf32>
    %25 = tpu.matmul %24, %13, %cst_13 {dimension_numbers = #tpu.dot_dimension_numbers<[0], [0], [1], [1], [0, 1, 1, 1], [], []>} : vector<64x32xf32>, vector<64x32xf32>, vector<32x32xf32> -> vector<32x32xf32>
    %c0_14 = arith.constant 0 : index
    %c0_15 = arith.constant 0 : index
    %26 = vector.load %arg1[%c0_14, %c0_15] : memref<32x32xf32, #tpu.memory_space<vmem>>, vector<32x32xf32>
    %27 = arith.addf %25, %26 : vector<32x32xf32>
    %cst_16 = arith.constant dense<0xFF800000> : vector<32xf32>
    %28 = vector.multi_reduction <maximumf>, %27, %cst_16 [1] : vector<32x32xf32> to vector<32xf32>
    %29 = vector.shape_cast %28 : vector<32xf32> to vector<32x1xf32>
    %30 = vector.broadcast %29 : vector<32x1xf32> to vector<32x32xf32>
    %31 = arith.subf %27, %30 : vector<32x32xf32>
    %32 = math.exp %31 : vector<32x32xf32>
    %cst_17 = arith.constant dense<0.000000e+00> : vector<32xf32>
    %33 = vector.multi_reduction <add>, %32, %cst_17 [1] : vector<32x32xf32> to vector<32xf32>
    %34 = vector.shape_cast %33 : vector<32xf32> to vector<32x1xf32>
    %35 = tpu.reciprocal %34 {approx = true} : vector<32x1xf32> -> vector<32x1xf32>
    %36 = vector.broadcast %35 : vector<32x1xf32> to vector<32x32xf32>
    %37 = arith.mulf %32, %36 : vector<32x32xf32>
    %cst_18 = arith.constant dense<0.000000e+00> : vector<64x32xf32>
    %38 = tpu.matmul %5, %37, %cst_18 {dimension_numbers = #tpu.dot_dimension_numbers<[1], [1], [0], [0], [0, 0, 1, 0], [], []>} : vector<64x32xf32>, vector<32x32xf32>, vector<64x32xf32> -> vector<64x32xf32>
    %c0_19 = arith.constant 0 : index
    %c0_20 = arith.constant 0 : index
    %39 = vector.load %arg7[%c0_19, %c0_20] : memref<32x32xf32, #tpu.memory_space<vmem>>, vector<32x32xf32>
    %cst_21 = arith.constant dense<0.000000e+00> : vector<64x32xf32>
    %40 = tpu.matmul %38, %39, %cst_21 {dimension_numbers = #tpu.dot_dimension_numbers<[1], [0], [0], [1], [0, 0, 1, 1], [], []>} : vector<64x32xf32>, vector<32x32xf32>, vector<64x32xf32> -> vector<64x32xf32>
    %c0_22 = arith.constant 0 : index
    %c0_23 = arith.constant 0 : index
    %41 = vector.load %arg8[%c0_22, %c0_23] : memref<1x32xf32, #tpu.memory_space<vmem>>, vector<1x32xf32>
    %42 = vector.broadcast %41 : vector<1x32xf32> to vector<64x32xf32>
    %43 = arith.addf %40, %42 : vector<64x32xf32>
    %c0_24 = arith.constant 0 : index
    %c0_25 = arith.constant 0 : index
    %c0_26 = arith.constant 0 : index
    %44 = vector.load %arg6[%c0_24, %c0_25, %c0_26] : memref<1x64x32xf32, #tpu.memory_space<vmem>>, vector<1x64x32xf32>
    %45 = vector.shape_cast %44 : vector<1x64x32xf32> to vector<64x32xf32>
    %46 = arith.addf %43, %45 : vector<64x32xf32>
    %c0_27 = arith.constant 0 : index
    %c0_28 = arith.constant 0 : index
    %c0_29 = arith.constant 0 : index
    %47 = vector.load %arg9[%c0_27, %c0_28, %c0_29] : memref<1x64x32xf32, #tpu.memory_space<vmem>>, vector<1x64x32xf32>
    %48 = vector.shape_cast %47 : vector<1x64x32xf32> to vector<64x32xf32>
    %49 = vector.shape_cast %46 : vector<64x32xf32> to vector<1x64x32xf32>
    tpu.vector_store %arg9[%c0_27, %c0_28, %c0_29], %49 {strides = array<i32>} : memref<1x64x32xf32, #tpu.memory_space<vmem>>, vector<1x64x32xf32>,
    return
  }
  func.func @transform_0(%arg0: i32) -> (i32, i32) {
    %c0_i32 = arith.constant 0 : i32
    %c0_i32_0 = arith.constant 0 : i32
    %c0_i32_1 = arith.constant 0 : i32
    return %c0_i32, %c0_i32_0 : i32, i32
  }
  func.func @transform_1(%arg0: i32) -> (i32, i32) {
    %c0_i32 = arith.constant 0 : i32
    %c0_i32_0 = arith.constant 0 : i32
    %c0_i32_1 = arith.constant 0 : i32
    return %c0_i32, %c0_i32_0 : i32, i32
  }
  func.func @transform_2(%arg0: i32) -> (i32, i32, i32) {
    %c0_i32 = arith.constant 0 : i32
    %c0_i32_0 = arith.constant 0 : i32
    %c0_i32_1 = arith.constant 0 : i32
    return %arg0, %c0_i32, %c0_i32_0 : i32, i32, i32
  }
  func.func @transform_3(%arg0: i32) -> (i32, i32, i32) {
    %c0_i32 = arith.constant 0 : i32
    %c0_i32_0 = arith.constant 0 : i32
    %c0_i32_1 = arith.constant 0 : i32
    return %arg0, %c0_i32, %c0_i32_0 : i32, i32, i32
  }
  func.func @transform_4(%arg0: i32) -> (i32, i32, i32) {
    %c0_i32 = arith.constant 0 : i32
    %c0_i32_0 = arith.constant 0 : i32
    %c0_i32_1 = arith.constant 0 : i32
    return %arg0, %c0_i32, %c0_i32_0 : i32, i32, i32
  }
  func.func @transform_5(%arg0: i32) -> (i32, i32, i32) {
    %c0_i32 = arith.constant 0 : i32
    %c0_i32_0 = arith.constant 0 : i32
    %c0_i32_1 = arith.constant 0 : i32
    return %arg0, %c0_i32, %c0_i32_0 : i32, i32, i32
  }
  func.func @transform_6(%arg0: i32) -> (i32, i32) {
    %c0_i32 = arith.constant 0 : i32
    %c0_i32_0 = arith.constant 0 : i32
    %c0_i32_1 = arith.constant 0 : i32
    return %c0_i32, %c0_i32_0 : i32, i32
  }
  func.func @transform_7(%arg0: i32) -> (i32, i32) {
    %c0_i32 = arith.constant 0 : i32
    %c0_i32_0 = arith.constant 0 : i32
    %c0_i32_1 = arith.constant 0 : i32
    return %c0_i32, %c0_i32_0 : i32, i32
  }
  func.func @transform_8(%arg0: i32) -> (i32, i32, i32) {
    %c0_i32 = arith.constant 0 : i32
    %c0_i32_0 = arith.constant 0 : i32
    %c0_i32_1 = arith.constant 0 : i32
    return %arg0, %c0_i32, %c0_i32_0 : i32, i32, i32
  }
}

</mosaic_0001>

<llo_original>
// kernel: multi_head_attention_forward.3
$region0: #{multi_head_attention_forward.3}
  #allocation0 [shape = 'u32[]', space=smem, size = 0x4, offset = 0x4, fixed_abs, tag = 'smem constant byte address 0x4 - core index']
  #allocation1 [shape = 'u32[144,128]{1,0:T(1,128)}', space=vmem, size = 0x12000, scoped, tag = 'internal scratch']
  %s0 = inlined_call_operand.hbm [shape: f32[128,32], index: 0, kind: input, shape index: {}]
  %s1 = inlined_call_operand.hbm [shape: f32[32,96], index: 1, kind: input, shape index: {}]
  %s2 = inlined_call_operand.vmem [shape: f32[128,96], index: 2, kind: output, shape index: {}]
  %s3 = sld [smem:[#allocation0]]
  $region49: #{multi_head_attention_forward.3} parent=0
    _
  %s5 = ssub.s32 1, %s3
  %s6 = scalar_select 0, %s5, %s3
  $region1: #{multi_head_attention_forward.3} parent=0
    #allocation2 [shape = 'u8[65536]{0}', space=vmem, size = 0x10000, scoped, tag = 'input window, operand 0']
    #allocation3 [shape = 's32[2]{0}', space=sflag, size = 0x8, scoped, tag = 'scoped memory for multi_head_attention_forward.3']
    #allocation4 [shape = 'u8[16384]{0}', space=vmem, size = 0x4000, scoped, tag = 'input window, operand 1, single buffered']
    #allocation5 [shape = 's32[1]{0}', space=sflag, size = 0x4, scoped, tag = 'scoped memory for multi_head_attention_forward.3']
    %7 = vsyncpa [#allocation3], 0
    %s8 = scalar_lea.sflag [#allocation3], 1
    %9 = vsyncpa %s8, 0
    %10 = vsyncpa [#allocation5], 0
    loop: start=0, step=1, limit=4
    $region2: #{multi_head_attention_forward.3} parent=1 // loop_pre_header
      _
    $region3: #{multi_head_attention_forward.3} parent=1 // loop_header
      %s12 = sphi 0, %s16
      %p13 = scmp.ge.s32.totalorder %s12, 4
      %s22 = sphi 0, %s24
      %s25 = sphi 0, %s22
      %s26 = sphi 0, %s25
      %s42 = sphi 0, %s26
      %s46 = sphi 0, %s46
      %s48 = sphi 0, %s46
      %s49 = sphi 0, %s48
      %s63 = sphi 0, %s49
      %s69 = sphi 0, %s71
      %s72 = sphi 0, %s69
      %s73 = sphi 0, %s72
      %s89 = sphi 0, %s73
    $region4: #{multi_head_attention_forward.3} parent=1 // loop_header_branch
      %15 = sbr.rel (%p13) target = $region8
    $region5: #{multi_head_attention_forward.3} parent=1 // loop_body
      %s17 = ssub.s32 %s12, 1
      %s18 = ssub.s32 %s12, 2
      %s19 = sadd.s32 %s12, 1
      %s20 = ssub.s32 %s12, %s19
      %p21 = scmp.eq.s32.totalorder %s20, 0
      %s23 = sadd.s32 %s22, 1
      %s24 = scalar_select %p21, %s22, %s23
      %p27 = pneg %p21
      %p28 = scmp.eq.s32.totalorder %s12, 1
      %p29 = por %p27, %p28
      %p30 = scmp.ne.s32.totalorder %s22, %s25
      %p31 = scmp.eq.s32.totalorder %s12, 0
      %p32 = por %p30, %p31
      %p33 = scmp.ne.s32.totalorder %s22, %s25
      %p34 = scmp.eq.s32.totalorder %s17, 1
      %p35 = por %p33, %p34
      %p36 = scmp.ne.s32.totalorder %s25, %s26
      %p37 = scmp.eq.s32.totalorder %s17, 0
      %p38 = por %p36, %p37
      %p39 = scmp.ne.s32.totalorder %s25, %s26
      %p40 = scmp.eq.s32.totalorder %s18, 1
      %p41 = por %p39, %p40
      %p43 = scmp.ne.s32.totalorder %s26, %s42
      %p44 = scmp.eq.s32.totalorder %s18, 0
      %p45 = por %p43, %p44
      %s47 = sadd.s32 %s46, 1
      %p50 = scmp.eq.s32.totalorder %s12, 1
      %p51 = scmp.ne.s32.totalorder %s46, %s48
      %p52 = scmp.eq.s32.totalorder %s12, 0
      %p53 = por %p51, %p52
      %p54 = scmp.ne.s32.totalorder %s46, %s48
      %p55 = scmp.eq.s32.totalorder %s17, 1
      %p56 = por %p54, %p55
      %p57 = scmp.ne.s32.totalorder %s48, %s49
      %p58 = scmp.eq.s32.totalorder %s17, 0
      %p59 = por %p57, %p58
      %p60 = scmp.ne.s32.totalorder %s48, %s49
      %p61 = scmp.eq.s32.totalorder %s18, 1
      %p62 = por %p60, %p61
      %p64 = scmp.ne.s32.totalorder %s49, %s63
      %p65 = scmp.eq.s32.totalorder %s18, 0
      %p66 = por %p64, %p65
      %s67 = ssub.s32 %s12, %s19
      %p68 = scmp.eq.s32.totalorder %s67, 0
      %s70 = sadd.s32 %s69, 1
      %s71 = scalar_select %p68, %s69, %s70
      %p74 = pneg %p68
      %p75 = scmp.eq.s32.totalorder %s12, 1
      %p76 = por %p74, %p75
      %p77 = scmp.ne.s32.totalorder %s69, %s72
      %p78 = scmp.eq.s32.totalorder %s12, 0
      %p79 = por %p77, %p78
      %p80 = scmp.ne.s32.totalorder %s69, %s72
      %p81 = scmp.eq.s32.totalorder %s17, 1
      %p82 = por %p80, %p81
      %p83 = scmp.ne.s32.totalorder %s72, %s73
      %p84 = scmp.eq.s32.totalorder %s17, 0
      %p85 = por %p83, %p84
      %p86 = scmp.ne.s32.totalorder %s72, %s73
      %p87 = scmp.eq.s32.totalorder %s18, 1
      %p88 = por %p86, %p87
      %p90 = scmp.ne.s32.totalorder %s73, %s89
      %p91 = scmp.eq.s32.totalorder %s18, 0
      %p92 = por %p90, %p91
      %p93 = scmp.le.s32.totalorder 1, %s12
      %p94 = scmp.lt.s32.totalorder %s12, 3
      %p95 = pnand %p93, %p94
      %p96 = pneg %p95
      // Predicated region
      $region9: #{multi_head_attention_forward.3} parent=5 // pred_check
        _
      $region10: #{multi_head_attention_forward.3} parent=5 // pred_check_branch
        %98 = sbr.rel (%p95) target = $region12
      $region11: #{multi_head_attention_forward.3} parent=5 // pred_region
        %s99 = ssub.s32 %s12, 1
        // Predicated region
        $region13: #{multi_head_attention_forward.3} parent=11 // pred_check
          %p100 = pneg %p59
        $region14: #{multi_head_attention_forward.3} parent=11 // pred_check_branch
          %102 = sbr.rel (%p100) target = $region16
        $region15: #{multi_head_attention_forward.3} parent=11 // pred_region
          %s104 = ssub.s32 512, 512
          %105 = vsyncadd [#allocation5], %s104
          %s106 = sshll.u32 [#allocation4], 4
          %s107 = int_to_ptr.vmem [resolvable:$true] %s106
          %112 = dma.hbm_to_vmem [thread:$0]  %s1, 512, %s107, [#allocation5], 128, 128, 8
        $region16: #{multi_head_attention_forward.3} parent=11 // pred_fallthru
          _
      $region12: #{multi_head_attention_forward.3} parent=5 // pred_fallthru
        _
      %p113 = scmp.lt.s32.totalorder %s12, 2
      // Predicated region
      $region17: #{multi_head_attention_forward.3} parent=5 // pred_check
        %p114 = pneg %p113
      $region18: #{multi_head_attention_forward.3} parent=5 // pred_check_branch
        %116 = sbr.rel (%p114) target = $region20
      $region19: #{multi_head_attention_forward.3} parent=5 // pred_region
        // Predicated region
        $region21: #{multi_head_attention_forward.3} parent=19 // pred_check
          %p117 = pneg %p32
        $region22: #{multi_head_attention_forward.3} parent=19 // pred_check_branch
          %119 = sbr.rel (%p117) target = $region24
        $region23: #{multi_head_attention_forward.3} parent=19 // pred_region
          %s120 = sand.u32 %s22, 1
          %s121 = scalar_lea.sflag [#allocation3], %s120
          %s122 = sand.u32 %s22, 1
          %s123 = smul.addr %s122, 64
          %s124 = scalar_lea.vmem [#allocation2], %s123
          %s125 = smul.u32 8, %s12
          %s127 = ssub.s32 1024, 1024
          %128 = vsyncadd %s121, %s127
          %s129 = smul.addr %s125, 128
          %s130 = scalar_lea.hbm %s0, %s129
          %s131 = sshll.u32 %s124, 4
          %s132 = int_to_ptr.vmem [resolvable:$true] %s131
          %137 = dma.hbm_to_vmem [thread:$0]  %s130, 1024, %s132, %s121, 128, 128, 8
        $region24: #{multi_head_attention_forward.3} parent=19 // pred_fallthru
          _
      $region20: #{multi_head_attention_forward.3} parent=5 // pred_fallthru
        _
      %p138 = scmp.le.s32.totalorder 1, %s12
      %p139 = scmp.lt.s32.totalorder %s12, 3
      %p140 = pnand %p138, %p139
      %p141 = pneg %p140
      // Predicated region
      $region25: #{multi_head_attention_forward.3} parent=5 // pred_check
        _
      $region26: #{multi_head_attention_forward.3} parent=5 // pred_check_branch
        %143 = sbr.rel (%p140) target = $region28
      $region27: #{multi_head_attention_forward.3} parent=5 // pred_region
        %s144 = ssub.s32 %s12, 1
        %s145 = sand.u32 %s25, 1
        %s146 = scalar_lea.sflag [#allocation3], %s145
        %s147 = sand.u32 %s25, 1
        %s148 = smul.addr %s147, 64
        %s149 = scalar_lea.vmem [#allocation2], %s148
        // Predicated region
        $region29: #{multi_head_attention_forward.3} parent=27 // pred_check
          %p150 = pneg %p38
        $region30: #{multi_head_attention_forward.3} parent=27 // pred_check_branch
          %152 = sbr.rel (%p150) target = $region32
        $region31: #{multi_head_attention_forward.3} parent=27 // pred_region
          %153 = dma.done %s146, 1024
        $region32: #{multi_head_attention_forward.3} parent=27 // pred_fallthru
          _
        // Predicated region
        $region33: #{multi_head_attention_forward.3} parent=27 // pred_check
          %p154 = pneg %p59
        $region34: #{multi_head_attention_forward.3} parent=27 // pred_check_branch
          %156 = sbr.rel (%p154) target = $region36
        $region35: #{multi_head_attention_forward.3} parent=27 // pred_region
          %157 = dma.done [#allocation5], 512
        $region36: #{multi_head_attention_forward.3} parent=27 // pred_fallthru
          _
        %s158 = sand.u32 %s25, 1
        %s159 = scalar_lea.sflag [#allocation3], %s158
        %s160 = sand.u32 %s25, 1
        %s161 = smul.addr %s160, 64
        %s162 = scalar_lea.vmem [#allocation2], %s161
        %p163 = pneg %p38
        %p164 = pneg %p35
        %p165 = pneg %p59
        %p166 = pneg %p56
        %p167 = pneg %p85
        %p168 = pneg %p82
        %s169 = smul.u32 8, %s17
        %p170 = scmp.lt.s32.totalorder %s169, 15
        %s171 = scalar_select %p170, %s169, 15
        %s172 = smul.addr %s171, 8
        %s173 = scalar_lea.vmem %s2, %s172
        %s174 = smul.u32 8, %s17
        %s175 = smul.u32 8, %s17
        %p176 = scmp.lt.s32.totalorder %s175, 15
        %s177 = scalar_select %p176, %s175, 15
        %s178 = smul.addr %s177, 8
        %s179 = scalar_lea.vmem %s2, %s178
        %s180 = smul.u32 8, %s17
        %v181 = vld [vmem:[%s149] sm:$0xff]
        %v182 = vld [vmem:[%s149 + $0x8] sm:$0xff]
        %v183 = vld [vmem:[%s149 + $0x10] sm:$0xff]
        %v184 = vld [vmem:[%s149 + $0x18] sm:$0xff]
        %v185 = vld [vmem:[%s149 + $0x20] sm:$0xff]
        %v186 = vld [vmem:[%s149 + $0x28] sm:$0xff]
        %v187 = vld [vmem:[%s149 + $0x30] sm:$0xff]
        %v188 = vld [vmem:[%s149 + $0x38] sm:$0xff]
        %v189 = vld [vmem:[#allocation4] sm:$0xff]
        %v190 = vld [vmem:[#allocation4 + $0x8] sm:$0xff]
        %v191 = vld [vmem:[#allocation4 + $0x10] sm:$0xff]
        %v192 = vld [vmem:[#allocation4 + $0x18] sm:$0xff]
        %vm193 = vcmask 261120
        %v195 = vsel %vm193, %v181, 0
        %v198 = vsel %vm193, %v182, 0
        %v201 = vsel %vm193, %v183, 0
        %v204 = vsel %vm193, %v184, 0
        %v207 = vsel %vm193, %v185, 0
        %v210 = vsel %vm193, %v186, 0
        %v213 = vsel %vm193, %v187, 0
        %v216 = vsel %vm193, %v188, 0
        %218 = vmatprep.subr.mxu0 0.0
        %219 = vmatpush1.msra.mxu0 %v189
        %220 = vmatprep.subr.mxu0 0.0
        %221 = vmatpush1.msra.mxu0 %v190
        %222 = vmatprep.subr.mxu0 0.0
        %223 = vmatpush1.msra.mxu0 %v191
        %224 = vmatprep.subr.mxu0 0.0
        %225 = vmatpush1.msra.mxu0 %v192
        %226 = vmatprep.subr.mxu0 0.0
        %227 = vmatpush1.msra.mxu0 0.0
        %228 = vmatprep.subr.mxu0 0.0
        %229 = vmatpush1.msra.mxu0 0.0
        %230 = vmatprep.subr.mxu0 0.0
        %231 = vmatpush1.msra.mxu0 0.0
        %232 = vmatprep.subr.mxu0 0.0
        %233 = vmatpush1.msra.mxu0 0.0
        %234 = vmatprep.subr.mxu0 0.0
        %235 = vmatpush1.msra.mxu0 0.0
        %236 = vmatprep.subr.mxu0 0.0
        %237 = vmatpush1.msra.mxu0 0.0
        %238 = vmatprep.subr.mxu0 0.0
        %239 = vmatpush1.msra.mxu0 0.0
        %240 = vmatprep.subr.mxu0 0.0
        %241 = vmatpush1.msra.mxu0 0.0
        %242 = vmatprep.subr.mxu0 0.0
        %243 = vmatpush1.msra.mxu0 0.0
        %244 = vmatprep.subr.mxu0 0.0
        %245 = vmatpush1.msra.mxu0 0.0
        %246 = vmatprep.subr.mxu0 0.0
        %247 = vmatpush1.msra.mxu0 0.0
        %248 = vmatprep.subr.mxu0 0.0
        %249 = vmatpush1.msra.mxu0 0.0
        %250 = vmatprep.subr.mxu0 0.0
        %251 = vmatpush1.msra.mxu0 0.0
        %252 = vmatprep.subr.mxu0 0.0
        %253 = vmatpush1.msra.mxu0 0.0
        %254 = vmatprep.subr.mxu0 0.0
        %255 = vmatpush1.msra.mxu0 0.0
        %256 = vmatprep.subr.mxu0 0.0
        %257 = vmatpush1.msra.mxu0 0.0
        %258 = vmatprep.subr.mxu0 0.0
        %259 = vmatpush1.msra.mxu0 0.0
        %260 = vmatprep.subr.mxu0 0.0
        %261 = vmatpush1.msra.mxu0 0.0
        %262 = vmatprep.subr.mxu0 0.0
        %263 = vmatpush1.msra.mxu0 0.0
        %264 = vmatprep.subr.mxu0 0.0
        %265 = vmatpush1.msra.mxu0 0.0
        %266 = vmatprep.subr.mxu0 0.0
        %267 = vmatpush1.msra.mxu0 0.0
        %268 = vmatprep.subr.mxu0 0.0
        %269 = vmatpush1.msra.mxu0 0.0
        %270 = vmatprep.subr.mxu0 0.0
        %271 = vmatpush1.msra.mxu0 0.0
        %272 = vmatprep.subr.mxu0 0.0
        %273 = vmatpush1.msra.mxu0 0.0
        %274 = vmatprep.subr.mxu0 0.0
        %275 = vmatpush1.msra.mxu0 0.0
        %276 = vmatprep.subr.mxu0 0.0
        %277 = vmatpush1.msra.mxu0 0.0
        %278 = vmatprep.subr.mxu0 0.0
        %279 = vmatpush1.msra.mxu0 0.0
        %280 = vmatprep.subr.mxu0 0.0
        %281 = vmatpush1.msra.mxu0 0.0
        %282 = vmatprep.mubr.f32.mxu0 0.0
        %283 = vmatmul.mubr.f32.gmra.mrb[0].mxu0 %v195
        %v284 = vpop.f32.mrb[0].mxu0
        %v285 = vadd.f32 0.0, %v284
        %v286 = vpop.f32.mrb[0].mxu0
        %287 = vmatprep.mubr.f32.mxu0 0.0
        %288 = vmatmul.mubr.f32.gmra.mrb[0].mxu0 %v198
        %v289 = vpop.f32.mrb[0].mxu0
        %v290 = vadd.f32 0.0, %v289
        %v291 = vpop.f32.mrb[0].mxu0
        %292 = vmatprep.mubr.f32.mxu0 0.0
        %293 = vmatmul.mubr.f32.gmra.mrb[0].mxu0 %v201
        %v294 = vpop.f32.mrb[0].mxu0
        %v295 = vadd.f32 0.0, %v294
        %v296 = vpop.f32.mrb[0].mxu0
        %297 = vmatprep.mubr.f32.mxu0 0.0
        %298 = vmatmul.mubr.f32.gmra.mrb[0].mxu0 %v204
        %v299 = vpop.f32.mrb[0].mxu0
        %v300 = vadd.f32 0.0, %v299
        %v301 = vpop.f32.mrb[0].mxu0
        %302 = vmatprep.mubr.f32.mxu0 0.0
        %303 = vmatmul.mubr.f32.gmra.mrb[0].mxu0 %v207
        %v304 = vpop.f32.mrb[0].mxu0
        %v305 = vadd.f32 0.0, %v304
        %v306 = vpop.f32.mrb[0].mxu0
        %307 = vmatprep.mubr.f32.mxu0 0.0
        %308 = vmatmul.mubr.f32.gmra.mrb[0].mxu0 %v210
        %v309 = vpop.f32.mrb[0].mxu0
        %v310 = vadd.f32 0.0, %v309
        %v311 = vpop.f32.mrb[0].mxu0
        %312 = vmatprep.mubr.f32.mxu0 0.0
        %313 = vmatmul.mubr.f32.gmra.mrb[0].mxu0 %v213
        %v314 = vpop.f32.mrb[0].mxu0
        %v315 = vadd.f32 0.0, %v314
        %v316 = vpop.f32.mrb[0].mxu0
        %317 = vmatprep.mubr.f32.mxu0 0.0
        %318 = vmatmul.mubr.f32.gmra.mrb[0].mxu0 %v216
        %v319 = vpop.f32.mrb[0].mxu0
        %v320 = vadd.f32 0.0, %v319
        %v321 = vpop.f32.mrb[0].mxu0
        %322 = vdwg.mxu0
        %vm323 = vcmask 785408
        %324 = vst.msk [vmem:[%s179] sm:$0xff] %vm323, %v285
        %325 = vst.msk [vmem:[%s179 + $0x8] sm:$0xff] %vm323, %v290
        %326 = vst.msk [vmem:[%s179 + $0x10] sm:$0xff] %vm323, %v295
        %327 = vst.msk [vmem:[%s179 + $0x18] sm:$0xff] %vm323, %v300
        %328 = vst.msk [vmem:[%s179 + $0x20] sm:$0xff] %vm323, %v305
        %329 = vst.msk [vmem:[%s179 + $0x28] sm:$0xff] %vm323, %v310
        %330 = vst.msk [vmem:[%s179 + $0x30] sm:$0xff] %vm323, %v315
        %331 = vst.msk [vmem:[%s179 + $0x38] sm:$0xff] %vm323, %v320
        %s332 = smul.u32 8, %s17
        %p333 = scmp.lt.s32.totalorder %s332, 15
        %s334 = scalar_select %p333, %s332, 15
        %s335 = smul.addr %s334, 8
        %s336 = scalar_lea.vmem %s2, %s335
        // Predicated region
        $region37: #{multi_head_attention_forward.3} parent=27 // pred_check
          %p337 = pneg %p82
        $region38: #{multi_head_attention_forward.3} parent=27 // pred_check_branch
          %339 = sbr.rel (%p337) target = $region40
        $region39: #{multi_head_attention_forward.3} parent=27 // pred_region
          %s340 = smul.u32 8, %s17
        $region40: #{multi_head_attention_forward.3} parent=27 // pred_fallthru
          _
      $region28: #{multi_head_attention_forward.3} parent=5 // pred_fallthru
        _
      %p341 = scmp.le.s32.totalorder 2, %s12
      // Predicated region
      $region41: #{multi_head_attention_forward.3} parent=5 // pred_check
        %p342 = pneg %p341
      $region42: #{multi_head_attention_forward.3} parent=5 // pred_check_branch
        %344 = sbr.rel (%p342) target = $region44
      $region43: #{multi_head_attention_forward.3} parent=5 // pred_region
        %s345 = ssub.s32 %s12, 2
        // Predicated region
        $region45: #{multi_head_attention_forward.3} parent=43 // pred_check
          %p346 = pneg %p88
        $region46: #{multi_head_attention_forward.3} parent=43 // pred_check_branch
          %348 = sbr.rel (%p346) target = $region48
        $region47: #{multi_head_attention_forward.3} parent=43 // pred_region
          %s349 = smul.u32 8, %s18
          %p350 = scmp.lt.s32.totalorder %s349, 15
          %s351 = scalar_select %p350, %s349, 15
          %s352 = smul.addr %s351, 8
          %s353 = scalar_lea.vmem %s2, %s352
        $region48: #{multi_head_attention_forward.3} parent=43 // pred_fallthru
          _
      $region44: #{multi_head_attention_forward.3} parent=5 // pred_fallthru
        _
    $region6: #{multi_head_attention_forward.3} parent=1 // loop_footer
      %s16 = sadd.s32 1, %s12
    $region7: #{multi_head_attention_forward.3} parent=1 // loop_footer_branch
      %11 = sbr.rel target = $region3
    $region8: #{multi_head_attention_forward.3} parent=1 // loop_exit
      _
    %354 = vsyncpa [#allocation3], 1
    %s355 = scalar_lea.sflag [#allocation3], 1
    %356 = vsyncpa %s355, 1
    %357 = vsyncpa [#allocation5], 1

// kernel: multi_head_attention_forward.4
$region0: #{multi_head_attention_forward.4}
  #allocation0 [shape = 'u32[]', space=smem, size = 0x4, offset = 0x4, fixed_abs, tag = 'smem constant byte address 0x4 - core index']
  #allocation1 [shape = 'u32[144,128]{1,0:T(1,128)}', space=vmem, size = 0x12000, scoped, tag = 'internal scratch']
  #allocation2 [shape = 'f32[1,10,320]{2,1,0:T(8,128)}', space=vmem, size = 0x6000, scoped, tag = 'scratch operand']
  #allocation3 [shape = 'f32[10,320]{1,0:T(8,128)}', space=vmem, size = 0x6000, scoped, tag = 'scratch operand']
  %s0 = inlined_call_operand.vmem [shape: f32[9,256], index: 0, kind: input, shape index: {}]
  %s1 = inlined_call_operand.vmem [shape: f32[9,256], index: 1, kind: input, shape index: {}]
  %s2 = inlined_call_operand.vmem [shape: f32[2,1,8,256], index: 2, kind: input, shape index: {}]
  %s3 = inlined_call_operand.vmem [shape: f32[2,8,256], index: 3, kind: output, shape index: {}]
  %s4 = sld [smem:[#allocation0]]
  $region45: #{multi_head_attention_forward.4} parent=0
    _
  %s6 = ssub.s32 1, %s4
  %s7 = scalar_select 0, %s6, %s4
  loop: start=0, step=1, limit=4
  $region2: #{multi_head_attention_forward.4} parent=0 // loop_pre_header
    _
  $region3: #{multi_head_attention_forward.4} parent=0 // loop_header
    %s9 = sphi 0, %s13
    %p10 = scmp.ge.s32.totalorder %s9, 4
    %s17 = sphi 0, %s17
    %s19 = sphi 0, %s17
    %s20 = sphi 0, %s19
    %s34 = sphi 0, %s20
    %s38 = sphi 0, %s38
    %s40 = sphi 0, %s38
    %s41 = sphi 0, %s40
    %s55 = sphi 0, %s41
    %s61 = sphi 0, %s63
    %s64 = sphi 0, %s61
    %s65 = sphi 0, %s64
    %s81 = sphi 0, %s65
    %s87 = sphi 0, %s89
    %s90 = sphi 0, %s87
    %s91 = sphi 0, %s90
    %s107 = sphi 0, %s91
  $region4: #{multi_head_attention_forward.4} parent=0 // loop_header_branch
    %12 = sbr.rel (%p10) target = $region8
  $region5: #{multi_head_attention_forward.4} parent=0 // loop_body
    %s14 = ssub.s32 %s9, 1
    %s15 = ssub.s32 %s9, 2
    %s16 = sadd.s32 %s9, 1
    %s18 = sadd.s32 %s17, 1
    %p21 = scmp.eq.s32.totalorder %s9, 1
    %p22 = scmp.ne.s32.totalorder %s17, %s19
    %p23 = scmp.eq.s32.totalorder %s9, 0
    %p24 = por %p22, %p23
    %p25 = scmp.ne.s32.totalorder %s17, %s19
    %p26 = scmp.eq.s32.totalorder %s14, 1
    %p27 = por %p25, %p26
    %p28 = scmp.ne.s32.totalorder %s19, %s20
    %p29 = scmp.eq.s32.totalorder %s14, 0
    %p30 = por %p28, %p29
    %p31 = scmp.ne.s32.totalorder %s19, %s20
    %p32 = scmp.eq.s32.totalorder %s15, 1
    %p33 = por %p31, %p32
    %p35 = scmp.ne.s32.totalorder %s20, %s34
    %p36 = scmp.eq.s32.totalorder %s15, 0
    %p37 = por %p35, %p36
    %s39 = sadd.s32 %s38, 1
    %p42 = scmp.eq.s32.totalorder %s9, 1
    %p43 = scmp.ne.s32.totalorder %s38, %s40
    %p44 = scmp.eq.s32.totalorder %s9, 0
    %p45 = por %p43, %p44
    %p46 = scmp.ne.s32.totalorder %s38, %s40
    %p47 = scmp.eq.s32.totalorder %s14, 1
    %p48 = por %p46, %p47
    %p49 = scmp.ne.s32.totalorder %s40, %s41
    %p50 = scmp.eq.s32.totalorder %s14, 0
    %p51 = por %p49, %p50
    %p52 = scmp.ne.s32.totalorder %s40, %s41
    %p53 = scmp.eq.s32.totalorder %s15, 1
    %p54 = por %p52, %p53
    %p56 = scmp.ne.s32.totalorder %s41, %s55
    %p57 = scmp.eq.s32.totalorder %s15, 0
    %p58 = por %p56, %p57
    %s59 = ssub.s32 %s9, %s16
    %p60 = scmp.eq.s32.totalorder %s59, 0
    %s62 = sadd.s32 %s61, 1
    %s63 = scalar_select %p60, %s61, %s62
    %p66 = pneg %p60
    %p67 = scmp.eq.s32.totalorder %s9, 1
    %p68 = por %p66, %p67
    %p69 = scmp.ne.s32.totalorder %s61, %s64
    %p70 = scmp.eq.s32.totalorder %s9, 0
    %p71 = por %p69, %p70
    %p72 = scmp.ne.s32.totalorder %s61, %s64
    %p73 = scmp.eq.s32.totalorder %s14, 1
    %p74 = por %p72, %p73
    %p75 = scmp.ne.s32.totalorder %s64, %s65
    %p76 = scmp.eq.s32.totalorder %s14, 0
    %p77 = por %p75, %p76
    %p78 = scmp.ne.s32.totalorder %s64, %s65
    %p79 = scmp.eq.s32.totalorder %s15, 1
    %p80 = por %p78, %p79
    %p82 = scmp.ne.s32.totalorder %s65, %s81
    %p83 = scmp.eq.s32.totalorder %s15, 0
    %p84 = por %p82, %p83
    %s85 = ssub.s32 %s9, %s16
    %p86 = scmp.eq.s32.totalorder %s85, 0
    %s88 = sadd.s32 %s87, 1
    %s89 = scalar_select %p86, %s87, %s88
    %p92 = pneg %p86
    %p93 = scmp.eq.s32.totalorder %s9, 1
    %p94 = por %p92, %p93
    %p95 = scmp.ne.s32.totalorder %s87, %s90
    %p96 = scmp.eq.s32.totalorder %s9, 0
    %p97 = por %p95, %p96
    %p98 = scmp.ne.s32.totalorder %s87, %s90
    %p99 = scmp.eq.s32.totalorder %s14, 1
    %p100 = por %p98, %p99
    %p101 = scmp.ne.s32.totalorder %s90, %s91
    %p102 = scmp.eq.s32.totalorder %s14, 0
    %p103 = por %p101, %p102
    %p104 = scmp.ne.s32.totalorder %s90, %s91
    %p105 = scmp.eq.s32.totalorder %s15, 1
    %p106 = por %p104, %p105
    %p108 = scmp.ne.s32.totalorder %s91, %s107
    %p109 = scmp.eq.s32.totalorder %s15, 0
    %p110 = por %p108, %p109
    %p111 = scmp.le.s32.totalorder 1, %s9
    %p112 = scmp.lt.s32.totalorder %s9, 3
    %p113 = pnand %p111, %p112
    %p114 = pneg %p113
    // Predicated region
    $region9: #{multi_head_attention_forward.4} parent=5 // pred_check
      _
    $region10: #{multi_head_attention_forward.4} parent=5 // pred_check_branch
      %116 = sbr.rel (%p113) target = $region12
    $region11: #{multi_head_attention_forward.4} parent=5 // pred_region
      %s117 = ssub.s32 %s9, 1
      // Predicated region
      $region13: #{multi_head_attention_forward.4} parent=11 // pred_check
        %p118 = pneg %p30
      $region14: #{multi_head_attention_forward.4} parent=11 // pred_check_branch
        %120 = sbr.rel (%p118) target = $region16
      $region15: #{multi_head_attention_forward.4} parent=11 // pred_region
        _
      $region16: #{multi_head_attention_forward.4} parent=11 // pred_fallthru
        _
      // Predicated region
      $region17: #{multi_head_attention_forward.4} parent=11 // pred_check
        %p121 = pneg %p51
      $region18: #{multi_head_attention_forward.4} parent=11 // pred_check_branch
        %123 = sbr.rel (%p121) target = $region20
      $region19: #{multi_head_attention_forward.4} parent=11 // pred_region
        _
      $region20: #{multi_head_attention_forward.4} parent=11 // pred_fallthru
        _
    $region12: #{multi_head_attention_forward.4} parent=5 // pred_fallthru
      _
    %p124 = scmp.lt.s32.totalorder %s9, 2
    // Predicated region
    $region21: #{multi_head_attention_forward.4} parent=5 // pred_check
      %p125 = pneg %p124
    $region22: #{multi_head_attention_forward.4} parent=5 // pred_check_branch
      %127 = sbr.rel (%p125) target = $region24
    $region23: #{multi_head_attention_forward.4} parent=5 // pred_region
      // Predicated region
      $region25: #{multi_head_attention_forward.4} parent=23 // pred_check
        %p128 = pneg %p71
      $region26: #{multi_head_attention_forward.4} parent=23 // pred_check_branch
        %130 = sbr.rel (%p128) target = $region28
      $region27: #{multi_head_attention_forward.4} parent=23 // pred_region
        %p131 = scmp.lt.s32.totalorder %s9, 1
        %s132 = scalar_select %p131, %s9, 1
        %s133 = smul.addr %s132, 2
        %s134 = smul.addr %s133, 8
        %s135 = scalar_lea.vmem %s2, %s134
      $region28: #{multi_head_attention_forward.4} parent=23 // pred_fallthru
        _
    $region24: #{multi_head_attention_forward.4} parent=5 // pred_fallthru
      _
    %p136 = scmp.le.s32.totalorder 1, %s9
    %p137 = scmp.lt.s32.totalorder %s9, 3
    %p138 = pnand %p136, %p137
    %p139 = pneg %p138
    // Predicated region
    $region29: #{multi_head_attention_forward.4} parent=5 // pred_check
      _
    $region30: #{multi_head_attention_forward.4} parent=5 // pred_check_branch
      %141 = sbr.rel (%p138) target = $region32
    $region31: #{multi_head_attention_forward.4} parent=5 // pred_region
      %s142 = ssub.s32 %s9, 1
      %p143 = pneg %p30
      %p144 = pneg %p27
      %p145 = pneg %p51
      %p146 = pneg %p48
      %p147 = scmp.lt.s32.totalorder %s14, 1
      %s148 = scalar_select %p147, %s14, 1
      %s149 = smul.addr %s148, 2
      %s150 = smul.addr %s149, 8
      %s151 = scalar_lea.vmem %s2, %s150
      %p152 = pneg %p77
      %p153 = pneg %p74
      %p154 = pneg %p103
      %p155 = pneg %p100
      %p156 = scmp.lt.s32.totalorder %s14, 1
      %s157 = scalar_select %p156, %s14, 1
      %s158 = smul.addr %s157, 2
      %s159 = smul.addr %s158, 8
      %s160 = scalar_lea.vmem %s3, %s159
      %p161 = scmp.lt.s32.totalorder %s14, 1
      %s162 = scalar_select %p161, %s14, 1
      %s163 = smul.addr %s162, 2
      %s164 = smul.addr %s163, 8
      %s165 = scalar_lea.vmem %s2, %s164
      %p166 = scmp.lt.s32.totalorder %s14, 1
      %s167 = scalar_select %p166, %s14, 1
      %s168 = smul.addr %s167, 2
      %s169 = smul.addr %s168, 8
      %s170 = scalar_lea.vmem %s3, %s169
      %v171 = vlaneseq
      %vm172 = vcmp.ge.s32.totalorder %v171, 0
      %vm173 = vcmp.lt.s32.totalorder %v171, 320
      %vm174 = vmand %vm172, %vm173
      %175 = vst.msk [vmem:[#allocation2] ss:$8 sm:$0x7] %vm174, 0.0
      %176 = vst.msk [vmem:[#allocation2] ss:$8 sm:$0x0] %vm174, 0.0
      %s177 = scalar_lea.vmem [#allocation2], 25
      %178 = vst.msk [vmem:[%s177] ss:$8 sm:$0x7] %vm174, 0.0
      %179 = vst.msk [vmem:[%s177] ss:$8 sm:$0x0] %vm174, 0.0
      %vm180 = vcmask 261121
      %181 = vst.msk [vmem:[#allocation2] sm:$0xfe] %vm180, 0.0
      %vm182 = vcmask 253952
      %183 = vst.msk [vmem:[#allocation2 + $0x18] sm:$0x1] %vm182, 0.0
      %vm184 = vcmask 523521
      %185 = vst.msk [vmem:[#allocation2 + $0x10] sm:$0xfe] %vm184, 0.0
      %vm186 = vcmask 516352
      %187 = vst.msk [vmem:[#allocation2 + $0x28] sm:$0x1] %vm186, 0.0
      %v188 = vld [vmem:[%s165] sm:$0xff]
      %v189 = vld [vmem:[%s165 + $0x8] sm:$0xff]
      %v192 = vrot.slane %v188, 7
      %v193 = vrot.slane %v189, 7
      %194 = vrot.lane.b32.xlu0 %v192, 32
      %v195 = vpop.permute.xlu0 %194
      %196 = vrot.lane.b32.xlu0 %v193, 32
      %v197 = vpop.permute.xlu0 %196
      %vm198 = vcmask 261120
      %v199 = vsel %vm198, %v195, %v197
      %vm203 = vcmask 1047809
      %204 = vst.msk [vmem:[#allocation2] sm:$0xfe] %vm203, %v195
      %205 = vst [vmem:[#allocation2 + $0x8] sm:$0xfe] %v199
      %206 = vst.msk [vmem:[#allocation2 + $0x10] sm:$0xfe] %vm180, %v197
      %vm207 = vcmask 1040640
      %208 = vst.msk [vmem:[#allocation2 + $0x18] sm:$0x1] %vm207, %v195
      %209 = vst [vmem:[#allocation2 + $0x20] sm:$0x1] %v199
      %210 = vst.msk [vmem:[#allocation2 + $0x28] sm:$0x1] %vm182, %v197
      %v211 = vld [vmem:[#allocation2] sm:$0xff]
      %v212 = vld [vmem:[#allocation2 + $0x8] sm:$0xff]
      %v213 = vld [vmem:[%s0] ss:$8 sm:$0x3]
      %v215 = vlaneseq
      %v216 = vshrl.u32 %v215, 7
      %v217 = vsub.s32 0, %v216
      %v218 = vrot.slane %v213, %v217
      %v219 = vlaneseq
      %v220 = vshrl.u32 %v219, 7
      %v221 = vsub.s32 1, %v220
      %v222 = vrot.slane %v213, %v221
      %v225 = vmul.f32 %v211, %v218
      %v226 = vmul.f32 %v212, %v222
      %v227 = vadd.f32 %v225, 0.0
      %v228 = vadd.f32 %v226, 0.0
      %v229 = vld [vmem:[#allocation2 + $0x10] sm:$0xff]
      %s230 = scalar_lea.vmem %s0, 1
      %v231 = vld [vmem:[%s230] ss:$8 sm:$0x3]
      %v233 = vlaneseq
      %v234 = vshrl.u32 %v233, 7
      %v235 = vsub.s32 0, %v234
      %v236 = vrot.slane %v231, %v235
      %v237 = vlaneseq
      %v238 = vshrl.u32 %v237, 7
      %v239 = vsub.s32 1, %v238
      %v240 = vrot.slane %v231, %v239
      %241 = vrot.lane.b32.xlu0 %v236, 32
      %v242 = vpop.permute.xlu0 %241
      %243 = vrot.lane.b32.xlu0 %v240, 32
      %v244 = vpop.permute.xlu0 %243
      %v245 = vsel %vm198, %v242, %v244
      %v249 = vmul.f32 %v211, %v242
      %v250 = vmul.f32 %v212, %v245
      %v251 = vmul.f32 %v229, %v244
      %255 = vrot.lane.b32.xlu0 %v249, 96
      %v256 = vpop.permute.xlu0 %255
      %257 = vrot.lane.b32.xlu0 %v250, 96
      %v258 = vpop.permute.xlu0 %257
      %259 = vrot.lane.b32.xlu0 %v251, 96
      %v260 = vpop.permute.xlu0 %259
      %vm261 = vcmask 785408
      %v262 = vsel %vm261, %v256, %v258
      %v263 = vsel %vm261, %v258, %v260
      %v266 = vadd.f32 %v227, %v262
      %v267 = vadd.f32 %v228, %v263
      %s268 = scalar_lea.vmem %s0, 2
      %v269 = vld [vmem:[%s268] ss:$8 sm:$0x3]
      %v271 = vlaneseq
      %v272 = vshrl.u32 %v271, 7
      %v273 = vsub.s32 0, %v272
      %v274 = vrot.slane %v269, %v273
      %v275 = vlaneseq
      %v276 = vshrl.u32 %v275, 7
      %v277 = vsub.s32 1, %v276
      %v278 = vrot.slane %v269, %v277
      %279 = vrot.lane.b32.xlu0 %v274, 64
      %v280 = vpop.permute.xlu0 %279
      %281 = vrot.lane.b32.xlu0 %v278, 64
      %v282 = vpop.permute.xlu0 %281
      %vm283 = vcmask 523264
      %v284 = vsel %vm283, %v280, %v282
      %v288 = vmul.f32 %v211, %v280
      %v289 = vmul.f32 %v212, %v284
      %v290 = vmul.f32 %v229, %v282
      %294 = vrot.lane.b32.xlu0 %v288, 64
      %v295 = vpop.permute.xlu0 %294
      %296 = vrot.lane.b32.xlu0 %v289, 64
      %v297 = vpop.permute.xlu0 %296
      %298 = vrot.lane.b32.xlu0 %v290, 64
      %v299 = vpop.permute.xlu0 %298
      %v300 = vsel %vm283, %v295, %v297
      %v301 = vsel %vm283, %v297, %v299
      %v304 = vadd.f32 %v266, %v300
      %v305 = vadd.f32 %v267, %v301
      %v306 = vld [vmem:[#allocation2] sm:$0xfe]
      %v307 = vld [vmem:[#allocation2 + $0x8] sm:$0xfe]
      %v308 = vld [vmem:[#allocation2 + $0x18] sm:$0x1]
      %v309 = vld [vmem:[#allocation2 + $0x20] sm:$0x1]
      %s310 = scalar_lea.vmem %s0, 3
      %v311 = vld [vmem:[%s310] ss:$8 sm:$0x3]
      %v313 = vlaneseq
      %v314 = vshrl.u32 %v313, 7
      %v315 = vsub.s32 0, %v314
      %v316 = vrot.slane %v311, %v315
      %v317 = vlaneseq
      %v318 = vshrl.u32 %v317, 7
      %v319 = vsub.s32 1, %v318
      %v320 = vrot.slane %v311, %v319
      %v323 = vmul.f32 %v306, %v316
      %v324 = vmul.f32 %v307, %v320
      %v325 = vmul.f32 %v308, %v316
      %v326 = vmul.f32 %v309, %v320
      %vm331 = vcmask 1046528
      %v332 = vrot.slane %v323, 1
      %v333 = vrot.slane %v325, 1
      %v334 = vsel %vm331, %v332, %v333
      %v335 = vrot.slane %v324, 1
      %v336 = vrot.slane %v326, 1
      %v337 = vsel %vm331, %v335, %v336
      %v340 = vadd.f32 %v304, %v334
      %v341 = vadd.f32 %v305, %v337
      %v342 = vld [vmem:[#allocation2 + $0x10] sm:$0xfe]
      %v343 = vld [vmem:[#allocation2 + $0x28] sm:$0x1]
      %s344 = scalar_lea.vmem %s0, 4
      %v345 = vld [vmem:[%s344] ss:$8 sm:$0x3]
      %v347 = vlaneseq
      %v348 = vshrl.u32 %v347, 7
      %v349 = vsub.s32 0, %v348
      %v350 = vrot.slane %v345, %v349
      %v351 = vlaneseq
      %v352 = vshrl.u32 %v351, 7
      %v353 = vsub.s32 1, %v352
      %v354 = vrot.slane %v345, %v353
      %355 = vrot.lane.b32.xlu0 %v350, 32
      %v356 = vpop.permute.xlu0 %355
      %357 = vrot.lane.b32.xlu0 %v354, 32
      %v358 = vpop.permute.xlu0 %357
      %v359 = vsel %vm198, %v356, %v358
      %v363 = vmul.f32 %v306, %v356
      %v364 = vmul.f32 %v307, %v359
      %v365 = vmul.f32 %v342, %v358
      %v366 = vmul.f32 %v308, %v356
      %v367 = vmul.f32 %v309, %v359
      %v368 = vmul.f32 %v343, %v358
      %v375 = vrot.slane %v363, 1
      %v376 = vrot.slane %v366, 1
      %v377 = vsel %vm331, %v375, %v376
      %v378 = vrot.slane %v364, 1
      %v379 = vrot.slane %v367, 1
      %v380 = vsel %vm331, %v378, %v379
      %v381 = vrot.slane %v365, 1
      %v382 = vrot.slane %v368, 1
      %v383 = vsel %vm331, %v381, %v382
      %384 = vrot.lane.b32.xlu0 %v377, 96
      %v385 = vpop.permute.xlu0 %384
      %386 = vrot.lane.b32.xlu0 %v380, 96
      %v387 = vpop.permute.xlu0 %386
      %388 = vrot.lane.b32.xlu0 %v383, 96
      %v389 = vpop.permute.xlu0 %388
      %v390 = vsel %vm261, %v385, %v387
      %v391 = vsel %vm261, %v387, %v389
      %v394 = vadd.f32 %v340, %v390
      %v395 = vadd.f32 %v341, %v391
      %s396 = scalar_lea.vmem %s0, 5
      %v397 = vld [vmem:[%s396] ss:$8 sm:$0x3]
      %v399 = vlaneseq
      %v400 = vshrl.u32 %v399, 7
      %v401 = vsub.s32 0, %v400
      %v402 = vrot.slane %v397, %v401
      %v403 = vlaneseq
      %v404 = vshrl.u32 %v403, 7
      %v405 = vsub.s32 1, %v404
      %v406 = vrot.slane %v397, %v405
      %407 = vrot.lane.b32.xlu0 %v402, 64
      %v408 = vpop.permute.xlu0 %407
      %409 = vrot.lane.b32.xlu0 %v406, 64
      %v410 = vpop.permute.xlu0 %409
      %v411 = vsel %vm283, %v408, %v410
      %v415 = vmul.f32 %v306, %v408
      %v416 = vmul.f32 %v307, %v411
      %v417 = vmul.f32 %v342, %v410
      %v418 = vmul.f32 %v308, %v408
      %v419 = vmul.f32 %v309, %v411
      %v420 = vmul.f32 %v343, %v410
      %v427 = vrot.slane %v415, 1
      %v428 = vrot.slane %v418, 1
      %v429 = vsel %vm331, %v427, %v428
      %v430 = vrot.slane %v416, 1
      %v431 = vrot.slane %v419, 1
      %v432 = vsel %vm331, %v430, %v431
      %v433 = vrot.slane %v417, 1
      %v434 = vrot.slane %v420, 1
      %v435 = vsel %vm331, %v433, %v434
      %436 = vrot.lane.b32.xlu0 %v429, 64
      %v437 = vpop.permute.xlu0 %436
      %438 = vrot.lane.b32.xlu0 %v432, 64
      %v439 = vpop.permute.xlu0 %438
      %440 = vrot.lane.b32.xlu0 %v435, 64
      %v441 = vpop.permute.xlu0 %440
      %v442 = vsel %vm283, %v437, %v439
      %v443 = vsel %vm283, %v439, %v441
      %v446 = vadd.f32 %v394, %v442
      %v447 = vadd.f32 %v395, %v443
      %v448 = vld [vmem:[#allocation2] sm:$0xfc]
      %v449 = vld [vmem:[#allocation2 + $0x8] sm:$0xfc]
      %v450 = vld [vmem:[#allocation2 + $0x18] sm:$0x3]
      %v451 = vld [vmem:[#allocation2 + $0x20] sm:$0x3]
      %s452 = scalar_lea.vmem %s0, 6
      %v453 = vld [vmem:[%s452] ss:$8 sm:$0x3]
      %v455 = vlaneseq
      %v456 = vshrl.u32 %v455, 7
      %v457 = vsub.s32 0, %v456
      %v458 = vrot.slane %v453, %v457
      %v459 = vlaneseq
      %v460 = vshrl.u32 %v459, 7
      %v461 = vsub.s32 1, %v460
      %v462 = vrot.slane %v453, %v461
      %v465 = vmul.f32 %v448, %v458
      %v466 = vmul.f32 %v449, %v462
      %v467 = vmul.f32 %v450, %v458
      %v468 = vmul.f32 %v451, %v462
      %vm473 = vcmask 1045504
      %v474 = vrot.slane %v465, 2
      %v475 = vrot.slane %v467, 2
      %v476 = vsel %vm473, %v474, %v475
      %v477 = vrot.slane %v466, 2
      %v478 = vrot.slane %v468, 2
      %v479 = vsel %vm473, %v477, %v478
      %v482 = vadd.f32 %v446, %v476
      %v483 = vadd.f32 %v447, %v479
      %v484 = vld [vmem:[#allocation2 + $0x10] sm:$0xfc]
      %v485 = vld [vmem:[#allocation2 + $0x28] sm:$0x3]
      %s486 = scalar_lea.vmem %s0, 7
      %v487 = vld [vmem:[%s486] ss:$8 sm:$0x3]
      %v489 = vlaneseq
      %v490 = vshrl.u32 %v489, 7
      %v491 = vsub.s32 0, %v490
      %v492 = vrot.slane %v487, %v491
      %v493 = vlaneseq
      %v494 = vshrl.u32 %v493, 7
      %v495 = vsub.s32 1, %v494
      %v496 = vrot.slane %v487, %v495
      %497 = vrot.lane.b32.xlu0 %v492, 32
      %v498 = vpop.permute.xlu0 %497
      %499 = vrot.lane.b32.xlu0 %v496, 32
      %v500 = vpop.permute.xlu0 %499
      %v501 = vsel %vm198, %v498, %v500
      %v505 = vmul.f32 %v448, %v498
      %v506 = vmul.f32 %v449, %v501
      %v507 = vmul.f32 %v484, %v500
      %v508 = vmul.f32 %v450, %v498
      %v509 = vmul.f32 %v451, %v501
      %v510 = vmul.f32 %v485, %v500
      %v517 = vrot.slane %v505, 2
      %v518 = vrot.slane %v508, 2
      %v519 = vsel %vm473, %v517, %v518
      %v520 = vrot.slane %v506, 2
      %v521 = vrot.slane %v509, 2
      %v522 = vsel %vm473, %v520, %v521
      %v523 = vrot.slane %v507, 2
      %v524 = vrot.slane %v510, 2
      %v525 = vsel %vm473, %v523, %v524
      %526 = vrot.lane.b32.xlu0 %v519, 96
      %v527 = vpop.permute.xlu0 %526
      %528 = vrot.lane.b32.xlu0 %v522, 96
      %v529 = vpop.permute.xlu0 %528
      %530 = vrot.lane.b32.xlu0 %v525, 96
      %v531 = vpop.permute.xlu0 %530
      %v532 = vsel %vm261, %v527, %v529
      %v533 = vsel %vm261, %v529, %v531
      %v536 = vadd.f32 %v482, %v532
      %v537 = vadd.f32 %v483, %v533
      %s538 = scalar_lea.vmem %s0, 16
      %v539 = vld [vmem:[%s538] ss:$8 sm:$0x3]
      %v541 = vlaneseq
      %v542 = vshrl.u32 %v541, 7
      %v543 = vsub.s32 0, %v542
      %v544 = vrot.slane %v539, %v543
      %v545 = vlaneseq
      %v546 = vshrl.u32 %v545, 7
      %v547 = vsub.s32 1, %v546
      %v548 = vrot.slane %v539, %v547
      %549 = vrot.lane.b32.xlu0 %v544, 64
      %v550 = vpop.permute.xlu0 %549
      %551 = vrot.lane.b32.xlu0 %v548, 64
      %v552 = vpop.permute.xlu0 %551
      %v553 = vsel %vm283, %v550, %v552
      %v557 = vmul.f32 %v448, %v550
      %v558 = vmul.f32 %v449, %v553
      %v559 = vmul.f32 %v484, %v552
      %v560 = vmul.f32 %v450, %v550
      %v561 = vmul.f32 %v451, %v553
      %v562 = vmul.f32 %v485, %v552
      %v569 = vrot.slane %v557, 2
      %v570 = vrot.slane %v560, 2
      %v571 = vsel %vm473, %v569, %v570
      %v572 = vrot.slane %v558, 2
      %v573 = vrot.slane %v561, 2
      %v574 = vsel %vm473, %v572, %v573
      %v575 = vrot.slane %v559, 2
      %v576 = vrot.slane %v562, 2
      %v577 = vsel %vm473, %v575, %v576
      %578 = vrot.lane.b32.xlu0 %v571, 64
      %v579 = vpop.permute.xlu0 %578
      %580 = vrot.lane.b32.xlu0 %v574, 64
      %v581 = vpop.permute.xlu0 %580
      %582 = vrot.lane.b32.xlu0 %v577, 64
      %v583 = vpop.permute.xlu0 %582
      %v584 = vsel %vm283, %v579, %v581
      %v585 = vsel %vm283, %v581, %v583
      %v588 = vadd.f32 %v536, %v584
      %v589 = vadd.f32 %v537, %v585
      %v590 = vmul.f32 %v588, 0.5
      %v591 = vmul.f32 %v589, 0.5
      %v592 = vmul.f32 %v588, 0.70710677
      %v593 = vmul.f32 %v589, 0.70710677
      %v594 = verf.f32.pop %v592
      %v595 = verf.f32.pop %v593
      %v596 = vadd.f32 %v594, 1.0
      %v597 = vadd.f32 %v595, 1.0
      %v598 = vmul.f32 %v590, %v596
      %v599 = vmul.f32 %v591, %v597
      %600 = vst.msk [vmem:[#allocation3] ss:$8 sm:$0x7] %vm174, 0.0
      %601 = vst.msk [vmem:[#allocation3] ss:$8 sm:$0x0] %vm174, 0.0
      %s602 = scalar_lea.vmem [#allocation3], 25
      %603 = vst.msk [vmem:[%s602] ss:$8 sm:$0x7] %vm174, 0.0
      %604 = vst.msk [vmem:[%s602] ss:$8 sm:$0x0] %vm174, 0.0
      %605 = vst.msk [vmem:[#allocation3] sm:$0xfe] %vm180, 0.0
      %606 = vst.msk [vmem:[#allocation3 + $0x18] sm:$0x1] %vm182, 0.0
      %607 = vst.msk [vmem:[#allocation3 + $0x10] sm:$0xfe] %vm184, 0.0
      %608 = vst.msk [vmem:[#allocation3 + $0x28] sm:$0x1] %vm186, 0.0
      %v611 = vrot.slane %v598, 7
      %v612 = vrot.slane %v599, 7
      %613 = vrot.lane.b32.xlu0 %v611, 32
      %v614 = vpop.permute.xlu0 %613
      %615 = vrot.lane.b32.xlu0 %v612, 32
      %v616 = vpop.permute.xlu0 %615
      %v617 = vsel %vm198, %v614, %v616
      %621 = vst.msk [vmem:[#allocation3] sm:$0xfe] %vm203, %v614
      %622 = vst [vmem:[#allocation3 + $0x8] sm:$0xfe] %v617
      %623 = vst.msk [vmem:[#allocation3 + $0x10] sm:$0xfe] %vm180, %v616
      %624 = vst.msk [vmem:[#allocation3 + $0x18] sm:$0x1] %vm207, %v614
      %625 = vst [vmem:[#allocation3 + $0x20] sm:$0x1] %v617
      %626 = vst.msk [vmem:[#allocation3 + $0x28] sm:$0x1] %vm182, %v616
      %v627 = vld [vmem:[#allocation3] sm:$0xff]
      %v628 = vld [vmem:[#allocation3 + $0x8] sm:$0xff]
      %v629 = vld [vmem:[%s1] ss:$8 sm:$0x3]
      %v631 = vlaneseq
      %v632 = vshrl.u32 %v631, 7
      %v633 = vsub.s32 0, %v632
      %v634 = vrot.slane %v629, %v633
      %v635 = vlaneseq
      %v636 = vshrl.u32 %v635, 7
      %v637 = vsub.s32 1, %v636
      %v638 = vrot.slane %v629, %v637
      %v641 = vmul.f32 %v627, %v634
      %v642 = vmul.f32 %v628, %v638
      %v643 = vadd.f32 %v641, 0.0
      %v644 = vadd.f32 %v642, 0.0
      %v645 = vld [vmem:[#allocation3 + $0x10] sm:$0xff]
      %s646 = scalar_lea.vmem %s1, 1
      %v647 = vld [vmem:[%s646] ss:$8 sm:$0x3]
      %v649 = vlaneseq
      %v650 = vshrl.u32 %v649, 7
      %v651 = vsub.s32 0, %v650
      %v652 = vrot.slane %v647, %v651
      %v653 = vlaneseq
      %v654 = vshrl.u32 %v653, 7
      %v655 = vsub.s32 1, %v654
      %v656 = vrot.slane %v647, %v655
      %657 = vrot.lane.b32.xlu0 %v652, 32
      %v658 = vpop.permute.xlu0 %657
      %659 = vrot.lane.b32.xlu0 %v656, 32
      %v660 = vpop.permute.xlu0 %659
      %v661 = vsel %vm198, %v658, %v660
      %v665 = vmul.f32 %v627, %v658
      %v666 = vmul.f32 %v628, %v661
      %v667 = vmul.f32 %v645, %v660
      %671 = vrot.lane.b32.xlu0 %v665, 96
      %v672 = vpop.permute.xlu0 %671
      %673 = vrot.lane.b32.xlu0 %v666, 96
      %v674 = vpop.permute.xlu0 %673
      %675 = vrot.lane.b32.xlu0 %v667, 96
      %v676 = vpop.permute.xlu0 %675
      %v677 = vsel %vm261, %v672, %v674
      %v678 = vsel %vm261, %v674, %v676
      %v681 = vadd.f32 %v643, %v677
      %v682 = vadd.f32 %v644, %v678
      %s683 = scalar_lea.vmem %s1, 2
      %v684 = vld [vmem:[%s683] ss:$8 sm:$0x3]
      %v686 = vlaneseq
      %v687 = vshrl.u32 %v686, 7
      %v688 = vsub.s32 0, %v687
      %v689 = vrot.slane %v684, %v688
      %v690 = vlaneseq
      %v691 = vshrl.u32 %v690, 7
      %v692 = vsub.s32 1, %v691
      %v693 = vrot.slane %v684, %v692
      %694 = vrot.lane.b32.xlu0 %v689, 64
      %v695 = vpop.permute.xlu0 %694
      %696 = vrot.lane.b32.xlu0 %v693, 64
      %v697 = vpop.permute.xlu0 %696
      %v698 = vsel %vm283, %v695, %v697
      %v702 = vmul.f32 %v627, %v695
      %v703 = vmul.f32 %v628, %v698
      %v704 = vmul.f32 %v645, %v697
      %708 = vrot.lane.b32.xlu0 %v702, 64
      %v709 = vpop.permute.xlu0 %708
      %710 = vrot.lane.b32.xlu0 %v703, 64
      %v711 = vpop.permute.xlu0 %710
      %712 = vrot.lane.b32.xlu0 %v704, 64
      %v713 = vpop.permute.xlu0 %712
      %v714 = vsel %vm283, %v709, %v711
      %v715 = vsel %vm283, %v711, %v713
      %v718 = vadd.f32 %v681, %v714
      %v719 = vadd.f32 %v682, %v715
      %v720 = vld [vmem:[#allocation3] sm:$0xfe]
      %v721 = vld [vmem:[#allocation3 + $0x8] sm:$0xfe]
      %v722 = vld [vmem:[#allocation3 + $0x18] sm:$0x1]
      %v723 = vld [vmem:[#allocation3 + $0x20] sm:$0x1]
      %s724 = scalar_lea.vmem %s1, 3
      %v725 = vld [vmem:[%s724] ss:$8 sm:$0x3]
      %v727 = vlaneseq
      %v728 = vshrl.u32 %v727, 7
      %v729 = vsub.s32 0, %v728
      %v730 = vrot.slane %v725, %v729
      %v731 = vlaneseq
      %v732 = vshrl.u32 %v731, 7
      %v733 = vsub.s32 1, %v732
      %v734 = vrot.slane %v725, %v733
      %v737 = vmul.f32 %v720, %v730
      %v738 = vmul.f32 %v721, %v734
      %v739 = vmul.f32 %v722, %v730
      %v740 = vmul.f32 %v723, %v734
      %v745 = vrot.slane %v737, 1
      %v746 = vrot.slane %v739, 1
      %v747 = vsel %vm331, %v745, %v746
      %v748 = vrot.slane %v738, 1
      %v749 = vrot.slane %v740, 1
      %v750 = vsel %vm331, %v748, %v749
      %v753 = vadd.f32 %v718, %v747
      %v754 = vadd.f32 %v719, %v750
      %v755 = vld [vmem:[#allocation3 + $0x10] sm:$0xfe]
      %v756 = vld [vmem:[#allocation3 + $0x28] sm:$0x1]
      %s757 = scalar_lea.vmem %s1, 4
      %v758 = vld [vmem:[%s757] ss:$8 sm:$0x3]
      %v760 = vlaneseq
      %v761 = vshrl.u32 %v760, 7
      %v762 = vsub.s32 0, %v761
      %v763 = vrot.slane %v758, %v762
      %v764 = vlaneseq
      %v765 = vshrl.u32 %v764, 7
      %v766 = vsub.s32 1, %v765
      %v767 = vrot.slane %v758, %v766
      %768 = vrot.lane.b32.xlu0 %v763, 32
      %v769 = vpop.permute.xlu0 %768
      %770 = vrot.lane.b32.xlu0 %v767, 32
      %v771 = vpop.permute.xlu0 %770
      %v772 = vsel %vm198, %v769, %v771
      %v776 = vmul.f32 %v720, %v769
      %v777 = vmul.f32 %v721, %v772
      %v778 = vmul.f32 %v755, %v771
      %v779 = vmul.f32 %v722, %v769
      %v780 = vmul.f32 %v723, %v772
      %v781 = vmul.f32 %v756, %v771
      %v788 = vrot.slane %v776, 1
      %v789 = vrot.slane %v779, 1
      %v790 = vsel %vm331, %v788, %v789
      %v791 = vrot.slane %v777, 1
      %v792 = vrot.slane %v780, 1
      %v793 = vsel %vm331, %v791, %v792
      %v794 = vrot.slane %v778, 1
      %v795 = vrot.slane %v781, 1
      %v796 = vsel %vm331, %v794, %v795
      %797 = vrot.lane.b32.xlu0 %v790, 96
      %v798 = vpop.permute.xlu0 %797
      %799 = vrot.lane.b32.xlu0 %v793, 96
      %v800 = vpop.permute.xlu0 %799
      %801 = vrot.lane.b32.xlu0 %v796, 96
      %v802 = vpop.permute.xlu0 %801
      %v803 = vsel %vm261, %v798, %v800
      %v804 = vsel %vm261, %v800, %v802
      %v807 = vadd.f32 %v753, %v803
      %v808 = vadd.f32 %v754, %v804
      %s809 = scalar_lea.vmem %s1, 5
      %v810 = vld [vmem:[%s809] ss:$8 sm:$0x3]
      %v812 = vlaneseq
      %v813 = vshrl.u32 %v812, 7
      %v814 = vsub.s32 0, %v813
      %v815 = vrot.slane %v810, %v814
      %v816 = vlaneseq
      %v817 = vshrl.u32 %v816, 7
      %v818 = vsub.s32 1, %v817
      %v819 = vrot.slane %v810, %v818
      %820 = vrot.lane.b32.xlu0 %v815, 64
      %v821 = vpop.permute.xlu0 %820
      %822 = vrot.lane.b32.xlu0 %v819, 64
      %v823 = vpop.permute.xlu0 %822
      %v824 = vsel %vm283, %v821, %v823
      %v828 = vmul.f32 %v720, %v821
      %v829 = vmul.f32 %v721, %v824
      %v830 = vmul.f32 %v755, %v823
      %v831 = vmul.f32 %v722, %v821
      %v832 = vmul.f32 %v723, %v824
      %v833 = vmul.f32 %v756, %v823
      %v840 = vrot.slane %v828, 1
      %v841 = vrot.slane %v831, 1
      %v842 = vsel %vm331, %v840, %v841
      %v843 = vrot.slane %v829, 1
      %v844 = vrot.slane %v832, 1
      %v845 = vsel %vm331, %v843, %v844
      %v846 = vrot.slane %v830, 1
      %v847 = vrot.slane %v833, 1
      %v848 = vsel %vm331, %v846, %v847
      %849 = vrot.lane.b32.xlu0 %v842, 64
      %v850 = vpop.permute.xlu0 %849
      %851 = vrot.lane.b32.xlu0 %v845, 64
      %v852 = vpop.permute.xlu0 %851
      %853 = vrot.lane.b32.xlu0 %v848, 64
      %v854 = vpop.permute.xlu0 %853
      %v855 = vsel %vm283, %v850, %v852
      %v856 = vsel %vm283, %v852, %v854
      %v859 = vadd.f32 %v807, %v855
      %v860 = vadd.f32 %v808, %v856
      %v861 = vld [vmem:[#allocation3] sm:$0xfc]
      %v862 = vld [vmem:[#allocation3 + $0x8] sm:$0xfc]
      %v863 = vld [vmem:[#allocation3 + $0x18] sm:$0x3]
      %v864 = vld [vmem:[#allocation3 + $0x20] sm:$0x3]
      %s865 = scalar_lea.vmem %s1, 6
      %v866 = vld [vmem:[%s865] ss:$8 sm:$0x3]
      %v868 = vlaneseq
      %v869 = vshrl.u32 %v868, 7
      %v870 = vsub.s32 0, %v869
      %v871 = vrot.slane %v866, %v870
      %v872 = vlaneseq
      %v873 = vshrl.u32 %v872, 7
      %v874 = vsub.s32 1, %v873
      %v875 = vrot.slane %v866, %v874
      %v878 = vmul.f32 %v861, %v871
      %v879 = vmul.f32 %v862, %v875
      %v880 = vmul.f32 %v863, %v871
      %v881 = vmul.f32 %v864, %v875
      %v886 = vrot.slane %v878, 2
      %v887 = vrot.slane %v880, 2
      %v888 = vsel %vm473, %v886, %v887
      %v889 = vrot.slane %v879, 2
      %v890 = vrot.slane %v881, 2
      %v891 = vsel %vm473, %v889, %v890
      %v894 = vadd.f32 %v859, %v888
      %v895 = vadd.f32 %v860, %v891
      %v896 = vld [vmem:[#allocation3 + $0x10] sm:$0xfc]
      %v897 = vld [vmem:[#allocation3 + $0x28] sm:$0x3]
      %s898 = scalar_lea.vmem %s1, 7
      %v899 = vld [vmem:[%s898] ss:$8 sm:$0x3]
      %v901 = vlaneseq
      %v902 = vshrl.u32 %v901, 7
      %v903 = vsub.s32 0, %v902
      %v904 = vrot.slane %v899, %v903
      %v905 = vlaneseq
      %v906 = vshrl.u32 %v905, 7
      %v907 = vsub.s32 1, %v906
      %v908 = vrot.slane %v899, %v907
      %909 = vrot.lane.b32.xlu0 %v904, 32
      %v910 = vpop.permute.xlu0 %909
      %911 = vrot.lane.b32.xlu0 %v908, 32
      %v912 = vpop.permute.xlu0 %911
      %v913 = vsel %vm198, %v910, %v912
      %v917 = vmul.f32 %v861, %v910
      %v918 = vmul.f32 %v862, %v913
      %v919 = vmul.f32 %v896, %v912
      %v920 = vmul.f32 %v863, %v910
      %v921 = vmul.f32 %v864, %v913
      %v922 = vmul.f32 %v897, %v912
      %v929 = vrot.slane %v917, 2
      %v930 = vrot.slane %v920, 2
      %v931 = vsel %vm473, %v929, %v930
      %v932 = vrot.slane %v918, 2
      %v933 = vrot.slane %v921, 2
      %v934 = vsel %vm473, %v932, %v933
      %v935 = vrot.slane %v919, 2
      %v936 = vrot.slane %v922, 2
      %v937 = vsel %vm473, %v935, %v936
      %938 = vrot.lane.b32.xlu0 %v931, 96
      %v939 = vpop.permute.xlu0 %938
      %940 = vrot.lane.b32.xlu0 %v934, 96
      %v941 = vpop.permute.xlu0 %940
      %942 = vrot.lane.b32.xlu0 %v937, 96
      %v943 = vpop.permute.xlu0 %942
      %v944 = vsel %vm261, %v939, %v941
      %v945 = vsel %vm261, %v941, %v943
      %v948 = vadd.f32 %v894, %v944
      %v949 = vadd.f32 %v895, %v945
      %s950 = scalar_lea.vmem %s1, 16
      %v951 = vld [vmem:[%s950] ss:$8 sm:$0x3]
      %v953 = vlaneseq
      %v954 = vshrl.u32 %v953, 7
      %v955 = vsub.s32 0, %v954
      %v956 = vrot.slane %v951, %v955
      %v957 = vlaneseq
      %v958 = vshrl.u32 %v957, 7
      %v959 = vsub.s32 1, %v958
      %v960 = vrot.slane %v951, %v959
      %961 = vrot.lane.b32.xlu0 %v956, 64
      %v962 = vpop.permute.xlu0 %961
      %963 = vrot.lane.b32.xlu0 %v960, 64
      %v964 = vpop.permute.xlu0 %963
      %v965 = vsel %vm283, %v962, %v964
      %v969 = vmul.f32 %v861, %v962
      %v970 = vmul.f32 %v862, %v965
      %v971 = vmul.f32 %v896, %v964
      %v972 = vmul.f32 %v863, %v962
      %v973 = vmul.f32 %v864, %v965
      %v974 = vmul.f32 %v897, %v964
      %v981 = vrot.slane %v969, 2
      %v982 = vrot.slane %v972, 2
      %v983 = vsel %vm473, %v981, %v982
      %v984 = vrot.slane %v970, 2
      %v985 = vrot.slane %v973, 2
      %v986 = vsel %vm473, %v984, %v985
      %v987 = vrot.slane %v971, 2
      %v988 = vrot.slane %v974, 2
      %v989 = vsel %vm473, %v987, %v988
      %990 = vrot.lane.b32.xlu0 %v983, 64
      %v991 = vpop.permute.xlu0 %990
      %992 = vrot.lane.b32.xlu0 %v986, 64
      %v993 = vpop.permute.xlu0 %992
      %994 = vrot.lane.b32.xlu0 %v989, 64
      %v995 = vpop.permute.xlu0 %994
      %v996 = vsel %vm283, %v991, %v993
      %v997 = vsel %vm283, %v993, %v995
      %v1000 = vadd.f32 %v948, %v996
      %v1001 = vadd.f32 %v949, %v997
      %1002 = vst [vmem:[%s170] sm:$0xff] %v1000
      %1003 = vst [vmem:[%s170 + $0x8] sm:$0xff] %v1001
      %p1004 = scmp.lt.s32.totalorder %s14, 1
      %s1005 = scalar_select %p1004, %s14, 1
      %s1006 = smul.addr %s1005, 2
      %s1007 = smul.addr %s1006, 8
      %s1008 = scalar_lea.vmem %s3, %s1007
      // Predicated region
      $region33: #{multi_head_attention_forward.4} parent=31 // pred_check
        %p1009 = pneg %p100
      $region34: #{multi_head_attention_forward.4} parent=31 // pred_check_branch
        %1011 = sbr.rel (%p1009) target = $region36
      $region35: #{multi_head_attention_forward.4} parent=31 // pred_region
        _
      $region36: #{multi_head_attention_forward.4} parent=31 // pred_fallthru
        _
    $region32: #{multi_head_attention_forward.4} parent=5 // pred_fallthru
      _
    %p1012 = scmp.le.s32.totalorder 2, %s9
    // Predicated region
    $region37: #{multi_head_attention_forward.4} parent=5 // pred_check
      %p1013 = pneg %p1012
    $region38: #{multi_head_attention_forward.4} parent=5 // pred_check_branch
      %1015 = sbr.rel (%p1013) target = $region40
    $region39: #{multi_head_attention_forward.4} parent=5 // pred_region
      %s1016 = ssub.s32 %s9, 2
      // Predicated region
      $region41: #{multi_head_attention_forward.4} parent=39 // pred_check
        %p1017 = pneg %p106
      $region42: #{multi_head_attention_forward.4} parent=39 // pred_check_branch
        %1019 = sbr.rel (%p1017) target = $region44
      $region43: #{multi_head_attention_forward.4} parent=39 // pred_region
        %p1020 = scmp.lt.s32.totalorder %s15, 1
        %s1021 = scalar_select %p1020, %s15, 1
        %s1022 = smul.addr %s1021, 2
        %s1023 = smul.addr %s1022, 8
        %s1024 = scalar_lea.vmem %s3, %s1023
      $region44: #{multi_head_attention_forward.4} parent=39 // pred_fallthru
        _
    $region40: #{multi_head_attention_forward.4} parent=5 // pred_fallthru
      _
  $region6: #{multi_head_attention_forward.4} parent=0 // loop_footer
    %s13 = sadd.s32 1, %s9
  $region7: #{multi_head_attention_forward.4} parent=0 // loop_footer_branch
    %8 = sbr.rel target = $region3
  $region8: #{multi_head_attention_forward.4} parent=0 // loop_exit
    _

// kernel: multi_head_attention_forward.5
$region0: #{multi_head_attention_forward.5}
  #allocation0 [shape = 'u32[]', space=smem, size = 0x4, offset = 0x4, fixed_abs, tag = 'smem constant byte address 0x4 - core index']
  #allocation1 [shape = 'u32[144,128]{1,0:T(1,128)}', space=vmem, size = 0x12000, scoped, tag = 'internal scratch']
  %s0 = inlined_call_operand.vmem [shape: f32[32,32], index: 0, kind: input, shape index: {}]
  %s1 = inlined_call_operand.vmem [shape: f32[1,32], index: 1, kind: input, shape index: {}]
  %s2 = inlined_call_operand.vmem [shape: f32[2,64,32], index: 2, kind: input, shape index: {}]
  %s3 = inlined_call_operand.vmem [shape: f32[2,64,32], index: 3, kind: input, shape index: {}]
  %s4 = inlined_call_operand.vmem [shape: f32[2,64,32], index: 4, kind: input, shape index: {}]
  %s5 = inlined_call_operand.vmem [shape: f32[2,64,32], index: 5, kind: input, shape index: {}]
  %s6 = inlined_call_operand.vmem [shape: f32[32,32], index: 6, kind: input, shape index: {}]
  %s7 = inlined_call_operand.vmem [shape: f32[1,32], index: 7, kind: input, shape index: {}]
  %s8 = inlined_call_operand.hbm [shape: f32[2,64,32], index: 8, kind: output, shape index: {}]
  %s9 = sld [smem:[#allocation0]]
  $region65: #{multi_head_attention_forward.5} parent=0
    _
  %s11 = ssub.s32 1, %s9
  %s12 = scalar_select 0, %s11, %s9
  $region1: #{multi_head_attention_forward.5} parent=0
    #allocation2 [shape = 'u8[65536]{0}', space=vmem, size = 0x10000, scoped, tag = 'output window, operand 0']
    #allocation3 [shape = 's32[2]{0}', space=sflag, size = 0x8, scoped, tag = 'scoped memory for multi_head_attention_forward.5']
    %13 = vsyncpa [#allocation3], 0
    %s14 = scalar_lea.sflag [#allocation3], 1
    %15 = vsyncpa %s14, 0
    loop: start=0, step=1, limit=4
    $region2: #{multi_head_attention_forward.5} parent=1 // loop_pre_header
      _
    $region3: #{multi_head_attention_forward.5} parent=1 // loop_header
      %s17 = sphi 0, %s21
      %p18 = scmp.ge.s32.totalorder %s17, 4
      %s25 = sphi 0, %s25
      %s27 = sphi 0, %s25
      %s28 = sphi 0, %s27
      %s42 = sphi 0, %s28
      %s46 = sphi 0, %s46
      %s48 = sphi 0, %s46
      %s49 = sphi 0, %s48
      %s63 = sphi 0, %s49
      %s69 = sphi 0, %s71
      %s72 = sphi 0, %s69
      %s73 = sphi 0, %s72
      %s89 = sphi 0, %s73
      %s95 = sphi 0, %s97
      %s98 = sphi 0, %s95
      %s99 = sphi 0, %s98
      %s115 = sphi 0, %s99
      %s121 = sphi 0, %s123
      %s124 = sphi 0, %s121
      %s125 = sphi 0, %s124
      %s141 = sphi 0, %s125
      %s147 = sphi 0, %s149
      %s150 = sphi 0, %s147
      %s151 = sphi 0, %s150
      %s167 = sphi 0, %s151
      %s171 = sphi 0, %s171
      %s173 = sphi 0, %s171
      %s174 = sphi 0, %s173
      %s188 = sphi 0, %s174
      %s192 = sphi 0, %s192
      %s194 = sphi 0, %s192
      %s195 = sphi 0, %s194
      %s209 = sphi 0, %s195
      %s215 = sphi 0, %s217
      %s218 = sphi 0, %s215
      %s219 = sphi 0, %s218
      %s235 = sphi 0, %s219
    $region4: #{multi_head_attention_forward.5} parent=1 // loop_header_branch
      %20 = sbr.rel (%p18) target = $region8
    $region5: #{multi_head_attention_forward.5} parent=1 // loop_body
      %s22 = ssub.s32 %s17, 1
      %s23 = ssub.s32 %s17, 2
      %s24 = sadd.s32 %s17, 1
      %s26 = sadd.s32 %s25, 1
      %p29 = scmp.eq.s32.totalorder %s17, 1
      %p30 = scmp.ne.s32.totalorder %s25, %s27
      %p31 = scmp.eq.s32.totalorder %s17, 0
      %p32 = por %p30, %p31
      %p33 = scmp.ne.s32.totalorder %s25, %s27
      %p34 = scmp.eq.s32.totalorder %s22, 1
      %p35 = por %p33, %p34
      %p36 = scmp.ne.s32.totalorder %s27, %s28
      %p37 = scmp.eq.s32.totalorder %s22, 0
      %p38 = por %p36, %p37
      %p39 = scmp.ne.s32.totalorder %s27, %s28
      %p40 = scmp.eq.s32.totalorder %s23, 1
      %p41 = por %p39, %p40
      %p43 = scmp.ne.s32.totalorder %s28, %s42
      %p44 = scmp.eq.s32.totalorder %s23, 0
      %p45 = por %p43, %p44
      %s47 = sadd.s32 %s46, 1
      %p50 = scmp.eq.s32.totalorder %s17, 1
      %p51 = scmp.ne.s32.totalorder %s46, %s48
      %p52 = scmp.eq.s32.totalorder %s17, 0
      %p53 = por %p51, %p52
      %p54 = scmp.ne.s32.totalorder %s46, %s48
      %p55 = scmp.eq.s32.totalorder %s22, 1
      %p56 = por %p54, %p55
      %p57 = scmp.ne.s32.totalorder %s48, %s49
      %p58 = scmp.eq.s32.totalorder %s22, 0
      %p59 = por %p57, %p58
      %p60 = scmp.ne.s32.totalorder %s48, %s49
      %p61 = scmp.eq.s32.totalorder %s23, 1
      %p62 = por %p60, %p61
      %p64 = scmp.ne.s32.totalorder %s49, %s63
      %p65 = scmp.eq.s32.totalorder %s23, 0
      %p66 = por %p64, %p65
      %s67 = ssub.s32 %s17, %s24
      %p68 = scmp.eq.s32.totalorder %s67, 0
      %s70 = sadd.s32 %s69, 1
      %s71 = scalar_select %p68, %s69, %s70
      %p74 = pneg %p68
      %p75 = scmp.eq.s32.totalorder %s17, 1
      %p76 = por %p74, %p75
      %p77 = scmp.ne.s32.totalorder %s69, %s72
      %p78 = scmp.eq.s32.totalorder %s17, 0
      %p79 = por %p77, %p78
      %p80 = scmp.ne.s32.totalorder %s69, %s72
      %p81 = scmp.eq.s32.totalorder %s22, 1
      %p82 = por %p80, %p81
      %p83 = scmp.ne.s32.totalorder %s72, %s73
      %p84 = scmp.eq.s32.totalorder %s22, 0
      %p85 = por %p83, %p84
      %p86 = scmp.ne.s32.totalorder %s72, %s73
      %p87 = scmp.eq.s32.totalorder %s23, 1
      %p88 = por %p86, %p87
      %p90 = scmp.ne.s32.totalorder %s73, %s89
      %p91 = scmp.eq.s32.totalorder %s23, 0
      %p92 = por %p90, %p91
      %s93 = ssub.s32 %s17, %s24
      %p94 = scmp.eq.s32.totalorder %s93, 0
      %s96 = sadd.s32 %s95, 1
      %s97 = scalar_select %p94, %s95, %s96
      %p100 = pneg %p94
      %p101 = scmp.eq.s32.totalorder %s17, 1
      %p102 = por %p100, %p101
      %p103 = scmp.ne.s32.totalorder %s95, %s98
      %p104 = scmp.eq.s32.totalorder %s17, 0
      %p105 = por %p103, %p104
      %p106 = scmp.ne.s32.totalorder %s95, %s98
      %p107 = scmp.eq.s32.totalorder %s22, 1
      %p108 = por %p106, %p107
      %p109 = scmp.ne.s32.totalorder %s98, %s99
      %p110 = scmp.eq.s32.totalorder %s22, 0
      %p111 = por %p109, %p110
      %p112 = scmp.ne.s32.totalorder %s98, %s99
      %p113 = scmp.eq.s32.totalorder %s23, 1
      %p114 = por %p112, %p113
      %p116 = scmp.ne.s32.totalorder %s99, %s115
      %p117 = scmp.eq.s32.totalorder %s23, 0
      %p118 = por %p116, %p117
      %s119 = ssub.s32 %s17, %s24
      %p120 = scmp.eq.s32.totalorder %s119, 0
      %s122 = sadd.s32 %s121, 1
      %s123 = scalar_select %p120, %s121, %s122
      %p126 = pneg %p120
      %p127 = scmp.eq.s32.totalorder %s17, 1
      %p128 = por %p126, %p127
      %p129 = scmp.ne.s32.totalorder %s121, %s124
      %p130 = scmp.eq.s32.totalorder %s17, 0
      %p131 = por %p129, %p130
      %p132 = scmp.ne.s32.totalorder %s121, %s124
      %p133 = scmp.eq.s32.totalorder %s22, 1
      %p134 = por %p132, %p133
      %p135 = scmp.ne.s32.totalorder %s124, %s125
      %p136 = scmp.eq.s32.totalorder %s22, 0
      %p137 = por %p135, %p136
      %p138 = scmp.ne.s32.totalorder %s124, %s125
      %p139 = scmp.eq.s32.totalorder %s23, 1
      %p140 = por %p138, %p139
      %p142 = scmp.ne.s32.totalorder %s125, %s141
      %p143 = scmp.eq.s32.totalorder %s23, 0
      %p144 = por %p142, %p143
      %s145 = ssub.s32 %s17, %s24
      %p146 = scmp.eq.s32.totalorder %s145, 0
      %s148 = sadd.s32 %s147, 1
      %s149 = scalar_select %p146, %s147, %s148
      %p152 = pneg %p146
      %p153 = scmp.eq.s32.totalorder %s17, 1
      %p154 = por %p152, %p153
      %p155 = scmp.ne.s32.totalorder %s147, %s150
      %p156 = scmp.eq.s32.totalorder %s17, 0
      %p157 = por %p155, %p156
      %p158 = scmp.ne.s32.totalorder %s147, %s150
      %p159 = scmp.eq.s32.totalorder %s22, 1
      %p160 = por %p158, %p159
      %p161 = scmp.ne.s32.totalorder %s150, %s151
      %p162 = scmp.eq.s32.totalorder %s22, 0
      %p163 = por %p161, %p162
      %p164 = scmp.ne.s32.totalorder %s150, %s151
      %p165 = scmp.eq.s32.totalorder %s23, 1
      %p166 = por %p164, %p165
      %p168 = scmp.ne.s32.totalorder %s151, %s167
      %p169 = scmp.eq.s32.totalorder %s23, 0
      %p170 = por %p168, %p169
      %s172 = sadd.s32 %s171, 1
      %p175 = scmp.eq.s32.totalorder %s17, 1
      %p176 = scmp.ne.s32.totalorder %s171, %s173
      %p177 = scmp.eq.s32.totalorder %s17, 0
      %p178 = por %p176, %p177
      %p179 = scmp.ne.s32.totalorder %s171, %s173
      %p180 = scmp.eq.s32.totalorder %s22, 1
      %p181 = por %p179, %p180
      %p182 = scmp.ne.s32.totalorder %s173, %s174
      %p183 = scmp.eq.s32.totalorder %s22, 0
      %p184 = por %p182, %p183
      %p185 = scmp.ne.s32.totalorder %s173, %s174
      %p186 = scmp.eq.s32.totalorder %s23, 1
      %p187 = por %p185, %p186
      %p189 = scmp.ne.s32.totalorder %s174, %s188
      %p190 = scmp.eq.s32.totalorder %s23, 0
      %p191 = por %p189, %p190
      %s193 = sadd.s32 %s192, 1
      %p196 = scmp.eq.s32.totalorder %s17, 1
      %p197 = scmp.ne.s32.totalorder %s192, %s194
      %p198 = scmp.eq.s32.totalorder %s17, 0
      %p199 = por %p197, %p198
      %p200 = scmp.ne.s32.totalorder %s192, %s194
      %p201 = scmp.eq.s32.totalorder %s22, 1
      %p202 = por %p200, %p201
      %p203 = scmp.ne.s32.totalorder %s194, %s195
      %p204 = scmp.eq.s32.totalorder %s22, 0
      %p205 = por %p203, %p204
      %p206 = scmp.ne.s32.totalorder %s194, %s195
      %p207 = scmp.eq.s32.totalorder %s23, 1
      %p208 = por %p206, %p207
      %p210 = scmp.ne.s32.totalorder %s195, %s209
      %p211 = scmp.eq.s32.totalorder %s23, 0
      %p212 = por %p210, %p211
      %s213 = ssub.s32 %s17, %s24
      %p214 = scmp.eq.s32.totalorder %s213, 0
      %s216 = sadd.s32 %s215, 1
      %s217 = scalar_select %p214, %s215, %s216
      %p220 = pneg %p214
      %p221 = scmp.eq.s32.totalorder %s17, 1
      %p222 = por %p220, %p221
      %p223 = scmp.ne.s32.totalorder %s215, %s218
      %p224 = scmp.eq.s32.totalorder %s17, 0
      %p225 = por %p223, %p224
      %p226 = scmp.ne.s32.totalorder %s215, %s218
      %p227 = scmp.eq.s32.totalorder %s22, 1
      %p228 = por %p226, %p227
      %p229 = scmp.ne.s32.totalorder %s218, %s219
      %p230 = scmp.eq.s32.totalorder %s22, 0
      %p231 = por %p229, %p230
      %p232 = scmp.ne.s32.totalorder %s218, %s219
      %p233 = scmp.eq.s32.totalorder %s23, 1
      %p234 = por %p232, %p233
      %p236 = scmp.ne.s32.totalorder %s219, %s235
      %p237 = scmp.eq.s32.totalorder %s23, 0
      %p238 = por %p236, %p237
      %p239 = scmp.le.s32.totalorder 1, %s17
      %p240 = scmp.lt.s32.totalorder %s17, 3
      %p241 = pnand %p239, %p240
      %p242 = pneg %p241
      // Predicated region
      $region9: #{multi_head_attention_forward.5} parent=5 // pred_check
        _
      $region10: #{multi_head_attention_forward.5} parent=5 // pred_check_branch
        %244 = sbr.rel (%p241) target = $region12
      $region11: #{multi_head_attention_forward.5} parent=5 // pred_region
        %s245 = ssub.s32 %s17, 1
        // Predicated region
        $region13: #{multi_head_attention_forward.5} parent=11 // pred_check
          %p246 = pneg %p38
        $region14: #{multi_head_attention_forward.5} parent=11 // pred_check_branch
          %248 = sbr.rel (%p246) target = $region16
        $region15: #{multi_head_attention_forward.5} parent=11 // pred_region
          _
        $region16: #{multi_head_attention_forward.5} parent=11 // pred_fallthru
          _
        // Predicated region
        $region17: #{multi_head_attention_forward.5} parent=11 // pred_check
          %p249 = pneg %p59
        $region18: #{multi_head_attention_forward.5} parent=11 // pred_check_branch
          %251 = sbr.rel (%p249) target = $region20
        $region19: #{multi_head_attention_forward.5} parent=11 // pred_region
          _
        $region20: #{multi_head_attention_forward.5} parent=11 // pred_fallthru
          _
        // Predicated region
        $region21: #{multi_head_attention_forward.5} parent=11 // pred_check
          %p252 = pneg %p184
        $region22: #{multi_head_attention_forward.5} parent=11 // pred_check_branch
          %254 = sbr.rel (%p252) target = $region24
        $region23: #{multi_head_attention_forward.5} parent=11 // pred_region
          _
        $region24: #{multi_head_attention_forward.5} parent=11 // pred_fallthru
          _
        // Predicated region
        $region25: #{multi_head_attention_forward.5} parent=11 // pred_check
          %p255 = pneg %p205
        $region26: #{multi_head_attention_forward.5} parent=11 // pred_check_branch
          %257 = sbr.rel (%p255) target = $region28
        $region27: #{multi_head_attention_forward.5} parent=11 // pred_region
          _
        $region28: #{multi_head_attention_forward.5} parent=11 // pred_fallthru
          _
      $region12: #{multi_head_attention_forward.5} parent=5 // pred_fallthru
        _
      %p258 = scmp.lt.s32.totalorder %s17, 2
      // Predicated region
      $region29: #{multi_head_attention_forward.5} parent=5 // pred_check
        %p259 = pneg %p258
      $region30: #{multi_head_attention_forward.5} parent=5 // pred_check_branch
        %261 = sbr.rel (%p259) target = $region32
      $region31: #{multi_head_attention_forward.5} parent=5 // pred_region
        // Predicated region
        $region33: #{multi_head_attention_forward.5} parent=31 // pred_check
          %p262 = pneg %p79
        $region34: #{multi_head_attention_forward.5} parent=31 // pred_check_branch
          %264 = sbr.rel (%p262) target = $region36
        $region35: #{multi_head_attention_forward.5} parent=31 // pred_region
          %p265 = scmp.lt.s32.totalorder %s17, 1
          %s266 = scalar_select %p265, %s17, 1
          %s267 = smul.addr %s266, 8
          %s268 = smul.addr %s267, 8
          %s269 = scalar_lea.vmem %s2, %s268
        $region36: #{multi_head_attention_forward.5} parent=31 // pred_fallthru
          _
        // Predicated region
        $region37: #{multi_head_attention_forward.5} parent=31 // pred_check
          %p270 = pneg %p105
        $region38: #{multi_head_attention_forward.5} parent=31 // pred_check_branch
          %272 = sbr.rel (%p270) target = $region40
        $region39: #{multi_head_attention_forward.5} parent=31 // pred_region
          %p273 = scmp.lt.s32.totalorder %s17, 1
          %s274 = scalar_select %p273, %s17, 1
          %s275 = smul.addr %s274, 8
          %s276 = smul.addr %s275, 8
          %s277 = scalar_lea.vmem %s3, %s276
        $region40: #{multi_head_attention_forward.5} parent=31 // pred_fallthru
          _
        // Predicated region
        $region41: #{multi_head_attention_forward.5} parent=31 // pred_check
          %p278 = pneg %p131
        $region42: #{multi_head_attention_forward.5} parent=31 // pred_check_branch
          %280 = sbr.rel (%p278) target = $region44
        $region43: #{multi_head_attention_forward.5} parent=31 // pred_region
          %p281 = scmp.lt.s32.totalorder %s17, 1
          %s282 = scalar_select %p281, %s17, 1
          %s283 = smul.addr %s282, 8
          %s284 = smul.addr %s283, 8
          %s285 = scalar_lea.vmem %s4, %s284
        $region44: #{multi_head_attention_forward.5} parent=31 // pred_fallthru
          _
        // Predicated region
        $region45: #{multi_head_attention_forward.5} parent=31 // pred_check
          %p286 = pneg %p157
        $region46: #{multi_head_attention_forward.5} parent=31 // pred_check_branch
          %288 = sbr.rel (%p286) target = $region48
        $region47: #{multi_head_attention_forward.5} parent=31 // pred_region
          %p289 = scmp.lt.s32.totalorder %s17, 1
          %s290 = scalar_select %p289, %s17, 1
          %s291 = smul.addr %s290, 8
          %s292 = smul.addr %s291, 8
          %s293 = scalar_lea.vmem %s5, %s292
        $region48: #{multi_head_attention_forward.5} parent=31 // pred_fallthru
          _
      $region32: #{multi_head_attention_forward.5} parent=5 // pred_fallthru
        _
      %p294 = scmp.le.s32.totalorder 1, %s17
      %p295 = scmp.lt.s32.totalorder %s17, 3
      %p296 = pnand %p294, %p295
      %p297 = pneg %p296
      // Predicated region
      $region49: #{multi_head_attention_forward.5} parent=5 // pred_check
        _
      $region50: #{multi_head_attention_forward.5} parent=5 // pred_check_branch
        %299 = sbr.rel (%p296) target = $region52
      $region51: #{multi_head_attention_forward.5} parent=5 // pred_region
        %s300 = ssub.s32 %s17, 1
        %p301 = pneg %p38
        %p302 = pneg %p35
        %p303 = pneg %p59
        %p304 = pneg %p56
        %p305 = scmp.lt.s32.totalorder %s22, 1
        %s306 = scalar_select %p305, %s22, 1
        %s307 = smul.addr %s306, 8
        %s308 = smul.addr %s307, 8
        %s309 = scalar_lea.vmem %s2, %s308
        %p310 = pneg %p85
        %p311 = pneg %p82
        %p312 = scmp.lt.s32.totalorder %s22, 1
        %s313 = scalar_select %p312, %s22, 1
        %s314 = smul.addr %s313, 8
        %s315 = smul.addr %s314, 8
        %s316 = scalar_lea.vmem %s3, %s315
        %p317 = pneg %p111
        %p318 = pneg %p108
        %p319 = scmp.lt.s32.totalorder %s22, 1
        %s320 = scalar_select %p319, %s22, 1
        %s321 = smul.addr %s320, 8
        %s322 = smul.addr %s321, 8
        %s323 = scalar_lea.vmem %s4, %s322
        %p324 = pneg %p137
        %p325 = pneg %p134
        %p326 = scmp.lt.s32.totalorder %s22, 1
        %s327 = scalar_select %p326, %s22, 1
        %s328 = smul.addr %s327, 8
        %s329 = smul.addr %s328, 8
        %s330 = scalar_lea.vmem %s5, %s329
        %p331 = pneg %p163
        %p332 = pneg %p160
        %p333 = pneg %p184
        %p334 = pneg %p181
        %p335 = pneg %p205
        %p336 = pneg %p202
        %p337 = pneg %p231
        %p338 = pneg %p228
        %s339 = sand.u32 %s218, 1
        %s340 = scalar_lea.sflag [#allocation3], %s339
        %s341 = sand.u32 %s218, 1
        %s342 = smul.addr %s341, 64
        %s343 = scalar_lea.vmem [#allocation2], %s342
        %p344 = scmp.lt.s32.totalorder %s22, 1
        %s345 = scalar_select %p344, %s22, 1
        %s346 = smul.addr %s345, 8
        %s347 = smul.addr %s346, 8
        %s348 = scalar_lea.vmem %s2, %s347
        %p349 = scmp.lt.s32.totalorder %s22, 1
        %s350 = scalar_select %p349, %s22, 1
        %s351 = smul.addr %s350, 8
        %s352 = smul.addr %s351, 8
        %s353 = scalar_lea.vmem %s3, %s352
        %p354 = scmp.lt.s32.totalorder %s22, 1
        %s355 = scalar_select %p354, %s22, 1
        %s356 = smul.addr %s355, 8
        %s357 = smul.addr %s356, 8
        %s358 = scalar_lea.vmem %s4, %s357
        %p359 = scmp.lt.s32.totalorder %s22, 1
        %s360 = scalar_select %p359, %s22, 1
        %s361 = smul.addr %s360, 8
        %s362 = smul.addr %s361, 8
        %s363 = scalar_lea.vmem %s5, %s362
        %v364 = vld [vmem:[%s348] sm:$0xff]
        %v365 = vld [vmem:[%s348 + $0x8] sm:$0xff]
        %v366 = vld [vmem:[%s348 + $0x10] sm:$0xff]
        %v367 = vld [vmem:[%s348 + $0x18] sm:$0xff]
        %v368 = vld [vmem:[%s348 + $0x20] sm:$0xff]
        %v369 = vld [vmem:[%s348 + $0x28] sm:$0xff]
        %v370 = vld [vmem:[%s348 + $0x30] sm:$0xff]
        %v371 = vld [vmem:[%s348 + $0x38] sm:$0xff]
        %v372 = vld [vmem:[%s353] sm:$0xff]
        %v373 = vld [vmem:[%s353 + $0x8] sm:$0xff]
        %v374 = vld [vmem:[%s353 + $0x10] sm:$0xff]
        %v375 = vld [vmem:[%s353 + $0x18] sm:$0xff]
        %v376 = vld [vmem:[%s353 + $0x20] sm:$0xff]
        %v377 = vld [vmem:[%s353 + $0x28] sm:$0xff]
        %v378 = vld [vmem:[%s353 + $0x30] sm:$0xff]
        %v379 = vld [vmem:[%s353 + $0x38] sm:$0xff]
        %v380 = vld [vmem:[%s358] sm:$0xff]
        %v381 = vld [vmem:[%s358 + $0x8] sm:$0xff]
        %v382 = vld [vmem:[%s358 + $0x10] sm:$0xff]
        %v383 = vld [vmem:[%s358 + $0x18] sm:$0xff]
        %v384 = vld [vmem:[%s358 + $0x20] sm:$0xff]
        %v385 = vld [vmem:[%s358 + $0x28] sm:$0xff]
        %v386 = vld [vmem:[%s358 + $0x30] sm:$0xff]
        %v387 = vld [vmem:[%s358 + $0x38] sm:$0xff]
        %v388 = vmul.f32 %v364, %v364
        %v389 = vmul.f32 %v365, %v365
        %v390 = vmul.f32 %v366, %v366
        %v391 = vmul.f32 %v367, %v367
        %v392 = vmul.f32 %v368, %v368
        %v393 = vmul.f32 %v369, %v369
        %v394 = vmul.f32 %v370, %v370
        %v395 = vmul.f32 %v371, %v371
        %vm396 = vcmask 261120
        %v397 = vsel %vm396, %v388, 0.0
        %v398 = vsel %vm396, %v389, 0.0
        %v399 = vadd.f32 %v397, %v398
        %v400 = vsel %vm396, %v390, 0.0
        %v401 = vadd.f32 %v399, %v400
        %v402 = vsel %vm396, %v391, 0.0
        %v403 = vadd.f32 %v401, %v402
        %v404 = vsel %vm396, %v392, 0.0
        %v405 = vadd.f32 %v403, %v404
        %v406 = vsel %vm396, %v393, 0.0
        %v407 = vadd.f32 %v405, %v406
        %v408 = vsel %vm396, %v394, 0.0
        %v409 = vadd.f32 %v407, %v408
        %v410 = vsel %vm396, %v395, 0.0
        %v411 = vadd.f32 %v409, %v410
        %v412 = vrot.slane %v411, 4
        %v413 = vadd.f32 %v411, %v412
        %v414 = vrot.slane %v413, 2
        %v415 = vadd.f32 %v413, %v414
        %v416 = vrot.slane %v415, 1
        %v417 = vadd.f32 %v415, %v416
        %v418 = vmax.f32 %v417, 1e-24
        %v419 = vrsqrt.pop %v418
        %v420 = vmul.f32 %v364, %v419
        %v421 = vmul.f32 %v365, %v419
        %v422 = vmul.f32 %v366, %v419
        %v423 = vmul.f32 %v367, %v419
        %v424 = vmul.f32 %v368, %v419
        %v425 = vmul.f32 %v369, %v419
        %v426 = vmul.f32 %v370, %v419
        %v427 = vmul.f32 %v371, %v419
        %v428 = vmul.f32 %v372, %v372
        %v429 = vmul.f32 %v373, %v373
        %v430 = vmul.f32 %v374, %v374
        %v431 = vmul.f32 %v375, %v375
        %v432 = vmul.f32 %v376, %v376
        %v433 = vmul.f32 %v377, %v377
        %v434 = vmul.f32 %v378, %v378
        %v435 = vmul.f32 %v379, %v379
        %v436 = vsel %vm396, %v428, 0.0
        %v437 = vsel %vm396, %v429, 0.0
        %v438 = vadd.f32 %v436, %v437
        %v439 = vsel %vm396, %v430, 0.0
        %v440 = vadd.f32 %v438, %v439
        %v441 = vsel %vm396, %v431, 0.0
        %v442 = vadd.f32 %v440, %v441
        %v443 = vsel %vm396, %v432, 0.0
        %v444 = vadd.f32 %v442, %v443
        %v445 = vsel %vm396, %v433, 0.0
        %v446 = vadd.f32 %v444, %v445
        %v447 = vsel %vm396, %v434, 0.0
        %v448 = vadd.f32 %v446, %v447
        %v449 = vsel %vm396, %v435, 0.0
        %v450 = vadd.f32 %v448, %v449
        %v451 = vrot.slane %v450, 4
        %v452 = vadd.f32 %v450, %v451
        %v453 = vrot.slane %v452, 2
        %v454 = vadd.f32 %v452, %v453
        %v455 = vrot.slane %v454, 1
        %v456 = vadd.f32 %v454, %v455
        %v457 = vmax.f32 %v456, 1e-24
        %v458 = vrsqrt.pop %v457
        %v459 = vmul.f32 %v372, %v458
        %v460 = vmul.f32 %v373, %v458
        %v461 = vmul.f32 %v374, %v458
        %v462 = vmul.f32 %v375, %v458
        %v463 = vmul.f32 %v376, %v458
        %v464 = vmul.f32 %v377, %v458
        %v465 = vmul.f32 %v378, %v458
        %v466 = vmul.f32 %v379, %v458
        %v467 = vld [vmem:[%s1] sm:$0x1]
        %v469 = vlaneseq
        %v470 = vshrl.u32 %v469, 7
        %v471 = vsub.s32 0, %v470
        %v472 = vrot.slane %v467, %v471
        %v474 = vmul.f32 %v459, %v472
        %v475 = vmul.f32 %v460, %v472
        %v476 = vmul.f32 %v461, %v472
        %v477 = vmul.f32 %v462, %v472
        %v478 = vmul.f32 %v463, %v472
        %v479 = vmul.f32 %v464, %v472
        %v480 = vmul.f32 %v465, %v472
        %v481 = vmul.f32 %v466, %v472
        %v482 = vld [vmem:[%s0] sm:$0xff]
        %v483 = vld [vmem:[%s0 + $0x8] sm:$0xff]
        %v484 = vld [vmem:[%s0 + $0x10] sm:$0xff]
        %v485 = vld [vmem:[%s0 + $0x18] sm:$0xff]
        %486 = vxpose.xlu0.b32.start [1/16] %v474, 128
        %487 = vxpose.xlu0.b32.cont [2/16] %v475, 128
        %488 = vxpose.xlu0.b32.cont [3/16] %v476, 128
        %489 = vxpose.xlu0.b32.cont [4/16] %v477, 128
        %490 = vxpose.xlu0.b32.cont [5/16] %v478, 128
        %491 = vxpose.xlu0.b32.cont [6/16] %v479, 128
        %492 = vxpose.xlu0.b32.cont [7/16] %v480, 128
        %493 = vxpose.xlu0.b32.cont [8/16] %v481, 128
        %494 = vxpose.xlu0.b32.cont [9/16] 0.0, 128
        %495 = vxpose.xlu0.b32.cont [10/16] 0.0, 128
        %496 = vxpose.xlu0.b32.cont [11/16] 0.0, 128
        %497 = vxpose.xlu0.b32.cont [12/16] 0.0, 128
        %498 = vxpose.xlu0.b32.cont [13/16] 0.0, 128
        %499 = vxpose.xlu0.b32.cont [14/16] 0.0, 128
        %500 = vxpose.xlu0.b32.cont [15/16] 0.0, 128
        %501 = vxpose.xlu0.b32.end [16/16] 0.0, 128
        %v502 = vpop.trf.xlu0
        %v503 = vpop.trf.xlu0
        %v504 = vpop.trf.xlu0
        %v505 = vpop.trf.xlu0
        %v506 = vpop.trf.xlu0
        %v507 = vpop.trf.xlu0
        %v508 = vpop.trf.xlu0
        %v509 = vpop.trf.xlu0
        %v510 = vpop.trf.xlu0
        %v511 = vpop.trf.xlu0
        %v512 = vpop.trf.xlu0
        %v513 = vpop.trf.xlu0
        %v514 = vpop.trf.xlu0
        %v515 = vpop.trf.xlu0
        %v516 = vpop.trf.xlu0
        %v517 = vpop.trf.xlu0
        %vm518 = vcmask 523264
        %v520 = vsel %vm518, %v502, 0
        %v523 = vsel %vm518, %v503, 0
        %v526 = vsel %vm518, %v504, 0
        %v529 = vsel %vm518, %v505, 0
        %531 = vmatprep.subr.mxu0 0.0
        %532 = vmatpush1.msra.mxu0 %v420
        %533 = vmatprep.subr.mxu0 0.0
        %534 = vmatpush1.msra.mxu0 %v421
        %535 = vmatprep.subr.mxu0 0.0
        %536 = vmatpush1.msra.mxu0 %v422
        %537 = vmatprep.subr.mxu0 0.0
        %538 = vmatpush1.msra.mxu0 %v423
        %539 = vmatprep.subr.mxu0 0.0
        %540 = vmatpush1.msra.mxu0 %v424
        %541 = vmatprep.subr.mxu0 0.0
        %542 = vmatpush1.msra.mxu0 %v425
        %543 = vmatprep.subr.mxu0 0.0
        %544 = vmatpush1.msra.mxu0 %v426
        %545 = vmatprep.subr.mxu0 0.0
        %546 = vmatpush1.msra.mxu0 %v427
        %547 = vmatprep.subr.mxu0 0.0
        %548 = vmatpush1.msra.mxu0 0.0
        %549 = vmatprep.subr.mxu0 0.0
        %550 = vmatpush1.msra.mxu0 0.0
        %551 = vmatprep.subr.mxu0 0.0
        %552 = vmatpush1.msra.mxu0 0.0
        %553 = vmatprep.subr.mxu0 0.0
        %554 = vmatpush1.msra.mxu0 0.0
        %555 = vmatprep.subr.mxu0 0.0
        %556 = vmatpush1.msra.mxu0 0.0
        %557 = vmatprep.subr.mxu0 0.0
        %558 = vmatpush1.msra.mxu0 0.0
        %559 = vmatprep.subr.mxu0 0.0
        %560 = vmatpush1.msra.mxu0 0.0
        %561 = vmatprep.subr.mxu0 0.0
        %562 = vmatpush1.msra.mxu0 0.0
        %563 = vmatprep.subr.mxu0 0.0
        %564 = vmatpush1.msra.mxu0 0.0
        %565 = vmatprep.subr.mxu0 0.0
        %566 = vmatpush1.msra.mxu0 0.0
        %567 = vmatprep.subr.mxu0 0.0
        %568 = vmatpush1.msra.mxu0 0.0
        %569 = vmatprep.subr.mxu0 0.0
        %570 = vmatpush1.msra.mxu0 0.0
        %571 = vmatprep.subr.mxu0 0.0
        %572 = vmatpush1.msra.mxu0 0.0
        %573 = vmatprep.subr.mxu0 0.0
        %574 = vmatpush1.msra.mxu0 0.0
        %575 = vmatprep.subr.mxu0 0.0
        %576 = vmatpush1.msra.mxu0 0.0
        %577 = vmatprep.subr.mxu0 0.0
        %578 = vmatpush1.msra.mxu0 0.0
        %579 = vmatprep.subr.mxu0 0.0
        %580 = vmatpush1.msra.mxu0 0.0
        %581 = vmatprep.subr.mxu0 0.0
        %582 = vmatpush1.msra.mxu0 0.0
        %583 = vmatprep.subr.mxu0 0.0
        %584 = vmatpush1.msra.mxu0 0.0
        %585 = vmatprep.subr.mxu0 0.0
        %586 = vmatpush1.msra.mxu0 0.0
        %587 = vmatprep.subr.mxu0 0.0
        %588 = vmatpush1.msra.mxu0 0.0
        %589 = vmatprep.subr.mxu0 0.0
        %590 = vmatpush1.msra.mxu0 0.0
        %591 = vmatprep.subr.mxu0 0.0
        %592 = vmatpush1.msra.mxu0 0.0
        %593 = vmatprep.subr.mxu0 0.0
        %594 = vmatpush1.msra.mxu0 0.0
        %595 = vmatprep.mubr.f32.mxu0 0.0
        %596 = vmatmul.mubr.f32.gmra.mrb[0].mxu0 %v520
        %v597 = vpop.f32.mrb[0].mxu0
        %v598 = vadd.f32 %v482, %v597
        %v599 = vpop.f32.mrb[0].mxu0
        %600 = vmatprep.mubr.f32.mxu0 0.0
        %601 = vmatmul.mubr.f32.gmra.mrb[0].mxu0 %v523
        %v602 = vpop.f32.mrb[0].mxu0
        %v603 = vadd.f32 %v483, %v602
        %v604 = vpop.f32.mrb[0].mxu0
        %605 = vmatprep.mubr.f32.mxu0 0.0
        %606 = vmatmul.mubr.f32.gmra.mrb[0].mxu0 %v526
        %v607 = vpop.f32.mrb[0].mxu0
        %v608 = vadd.f32 %v484, %v607
        %v609 = vpop.f32.mrb[0].mxu0
        %610 = vmatprep.mubr.f32.mxu0 0.0
        %611 = vmatmul.mubr.f32.gmra.mrb[0].mxu0 %v529
        %v612 = vpop.f32.mrb[0].mxu0
        %v613 = vadd.f32 %v485, %v612
        %v614 = vpop.f32.mrb[0].mxu0
        %615 = vdwg.mxu0
        %v616 = vsel %vm396, %v598, -inf
        %617 = vmax.xlane.f32.xlu0 %v616
        %v618 = vpop.xlane.xlu0 %617
        %v619 = vsel %vm396, %v603, -inf
        %620 = vmax.xlane.f32.xlu0 %v619
        %v621 = vpop.xlane.xlu0 %620
        %v622 = vsel %vm396, %v608, -inf
        %623 = vmax.xlane.f32.xlu0 %v622
        %v624 = vpop.xlane.xlu0 %623
        %v625 = vsel %vm396, %v613, -inf
        %626 = vmax.xlane.f32.xlu0 %v625
        %v627 = vpop.xlane.xlu0 %626
        %v628 = vsub.f32 %v598, %v618
        %v629 = vsub.f32 %v603, %v621
        %v630 = vsub.f32 %v608, %v624
        %v631 = vsub.f32 %v613, %v627
        %v632 = vmul.f32 %v628, 1.442695
        %v633 = vpow.pop %v632
        %v634 = vmul.f32 %v629, 1.442695
        %v635 = vpow.pop %v634
        %v636 = vmul.f32 %v630, 1.442695
        %v637 = vpow.pop %v636
        %v638 = vmul.f32 %v631, 1.442695
        %v639 = vpow.pop %v638
        %v640 = vsel %vm396, %v633, 0.0
        %641 = vadd.xlane.f32.xlu0 %v640
        %v642 = vpop.xlane.xlu0 %641
        %v643 = vsel %vm396, %v635, 0.0
        %644 = vadd.xlane.f32.xlu0 %v643
        %v645 = vpop.xlane.xlu0 %644
        %v646 = vsel %vm396, %v637, 0.0
        %647 = vadd.xlane.f32.xlu0 %v646
        %v648 = vpop.xlane.xlu0 %647
        %v649 = vsel %vm396, %v639, 0.0
        %650 = vadd.xlane.f32.xlu0 %v649
        %v651 = vpop.xlane.xlu0 %650
        %v652 = vrcp.pop %v642
        %v653 = vrcp.pop %v645
        %v654 = vrcp.pop %v648
        %v655 = vrcp.pop %v651
        %v656 = vmul.f32 %v633, %v652
        %v657 = vmul.f32 %v635, %v653
        %v658 = vmul.f32 %v637, %v654
        %v659 = vmul.f32 %v639, %v655
        %v661 = vsel %vm396, %v380, 0
        %v664 = vsel %vm396, %v381, 0
        %v667 = vsel %vm396, %v382, 0
        %v670 = vsel %vm396, %v383, 0
        %v673 = vsel %vm396, %v384, 0
        %v676 = vsel %vm396, %v385, 0
        %v679 = vsel %vm396, %v386, 0
        %v682 = vsel %vm396, %v387, 0
        %v685 = vsel %vm396, %v656, 0
        %v688 = vsel %vm396, %v657, 0
        %v691 = vsel %vm396, %v658, 0
        %v694 = vsel %vm396, %v659, 0
        %696 = vmatprep.subr.mxu0 0.0
        %697 = vmatpush1.xpose.msra.mxu0 %v685
        %698 = vmatprep.subr.mxu0 0.0
        %699 = vmatpush1.xpose.msra.mxu0 %v688
        %700 = vmatprep.subr.mxu0 0.0
        %701 = vmatpush1.xpose.msra.mxu0 %v691
        %702 = vmatprep.subr.mxu0 0.0
        %703 = vmatpush1.xpose.msra.mxu0 %v694
        %704 = vmatprep.subr.mxu0 0.0
        %705 = vmatpush1.xpose.msra.mxu0 0.0
        %706 = vmatprep.subr.mxu0 0.0
        %707 = vmatpush1.xpose.msra.mxu0 0.0
        %708 = vmatprep.subr.mxu0 0.0
        %709 = vmatpush1.xpose.msra.mxu0 0.0
        %710 = vmatprep.subr.mxu0 0.0
        %711 = vmatpush1.xpose.msra.mxu0 0.0
        %712 = vmatprep.subr.mxu0 0.0
        %713 = vmatpush1.xpose.msra.mxu0 0.0
        %714 = vmatprep.subr.mxu0 0.0
        %715 = vmatpush1.xpose.msra.mxu0 0.0
        %716 = vmatprep.subr.mxu0 0.0
        %717 = vmatpush1.xpose.msra.mxu0 0.0
        %718 = vmatprep.subr.mxu0 0.0
        %719 = vmatpush1.xpose.msra.mxu0 0.0
        %720 = vmatprep.subr.mxu0 0.0
        %721 = vmatpush1.xpose.msra.mxu0 0.0
        %722 = vmatprep.subr.mxu0 0.0
        %723 = vmatpush1.xpose.msra.mxu0 0.0
        %724 = vmatprep.subr.mxu0 0.0
        %725 = vmatpush1.xpose.msra.mxu0 0.0
        %726 = vmatprep.subr.mxu0 0.0
        %727 = vmatpush1.xpose.msra.mxu0 0.0
        %728 = vmatprep.subr.mxu0 0.0
        %729 = vmatpush1.xpose.msra.mxu0 0.0
        %730 = vmatprep.subr.mxu0 0.0
        %731 = vmatpush1.xpose.msra.mxu0 0.0
        %732 = vmatprep.subr.mxu0 0.0
        %733 = vmatpush1.xpose.msra.mxu0 0.0
        %734 = vmatprep.subr.mxu0 0.0
        %735 = vmatpush1.xpose.msra.mxu0 0.0
        %736 = vmatprep.subr.mxu0 0.0
        %737 = vmatpush1.xpose.msra.mxu0 0.0
        %738 = vmatprep.subr.mxu0 0.0
        %739 = vmatpush1.xpose.msra.mxu0 0.0
        %740 = vmatprep.subr.mxu0 0.0
        %741 = vmatpush1.xpose.msra.mxu0 0.0
        %742 = vmatprep.subr.mxu0 0.0
        %743 = vmatpush1.xpose.msra.mxu0 0.0
        %744 = vmatprep.subr.mxu0 0.0
        %745 = vmatpush1.xpose.msra.mxu0 0.0
        %746 = vmatprep.subr.mxu0 0.0
        %747 = vmatpush1.xpose.msra.mxu0 0.0
        %748 = vmatprep.subr.mxu0 0.0
        %749 = vmatpush1.xpose.msra.mxu0 0.0
        %750 = vmatprep.subr.mxu0 0.0
        %751 = vmatpush1.xpose.msra.mxu0 0.0
        %752 = vmatprep.subr.mxu0 0.0
        %753 = vmatpush1.xpose.msra.mxu0 0.0
        %754 = vmatprep.subr.mxu0 0.0
        %755 = vmatpush1.xpose.msra.mxu0 0.0
        %756 = vmatprep.subr.mxu0 0.0
        %757 = vmatpush1.xpose.msra.mxu0 0.0
        %758 = vmatprep.subr.mxu0 0.0
        %759 = vmatpush1.xpose.msra.mxu0 0.0
        %760 = vmatprep.mubr.f32.mxu0 0.0
        %761 = vmatmul.mubr.f32.gmra.mrb[0].mxu0 %v661
        %v762 = vpop.f32.mrb[0].mxu0
        %v763 = vadd.f32 0.0, %v762
        %v764 = vpop.f32.mrb[0].mxu0
        %765 = vmatprep.mubr.f32.mxu0 0.0
        %766 = vmatmul.mubr.f32.gmra.mrb[0].mxu0 %v664
        %v767 = vpop.f32.mrb[0].mxu0
        %v768 = vadd.f32 0.0, %v767
        %v769 = vpop.f32.mrb[0].mxu0
        %770 = vmatprep.mubr.f32.mxu0 0.0
        %771 = vmatmul.mubr.f32.gmra.mrb[0].mxu0 %v667
        %v772 = vpop.f32.mrb[0].mxu0
        %v773 = vadd.f32 0.0, %v772
        %v774 = vpop.f32.mrb[0].mxu0
        %775 = vmatprep.mubr.f32.mxu0 0.0
        %776 = vmatmul.mubr.f32.gmra.mrb[0].mxu0 %v670
        %v777 = vpop.f32.mrb[0].mxu0
        %v778 = vadd.f32 0.0, %v777
        %v779 = vpop.f32.mrb[0].mxu0
        %780 = vmatprep.mubr.f32.mxu0 0.0
        %781 = vmatmul.mubr.f32.gmra.mrb[0].mxu0 %v673
        %v782 = vpop.f32.mrb[0].mxu0
        %v783 = vadd.f32 0.0, %v782
        %v784 = vpop.f32.mrb[0].mxu0
        %785 = vmatprep.mubr.f32.mxu0 0.0
        %786 = vmatmul.mubr.f32.gmra.mrb[0].mxu0 %v676
        %v787 = vpop.f32.mrb[0].mxu0
        %v788 = vadd.f32 0.0, %v787
        %v789 = vpop.f32.mrb[0].mxu0
        %790 = vmatprep.mubr.f32.mxu0 0.0
        %791 = vmatmul.mubr.f32.gmra.mrb[0].mxu0 %v679
        %v792 = vpop.f32.mrb[0].mxu0
        %v793 = vadd.f32 0.0, %v792
        %v794 = vpop.f32.mrb[0].mxu0
        %795 = vmatprep.mubr.f32.mxu0 0.0
        %796 = vmatmul.mubr.f32.gmra.mrb[0].mxu0 %v682
        %v797 = vpop.f32.mrb[0].mxu0
        %v798 = vadd.f32 0.0, %v797
        %v799 = vpop.f32.mrb[0].mxu0
        %800 = vdwg.mxu0
        %v801 = vld [vmem:[%s6] sm:$0xff]
        %v802 = vld [vmem:[%s6 + $0x8] sm:$0xff]
        %v803 = vld [vmem:[%s6 + $0x10] sm:$0xff]
        %v804 = vld [vmem:[%s6 + $0x18] sm:$0xff]
        %v805 = vld [vmem:[%s7] sm:$0x1]
        %v807 = vlaneseq
        %v808 = vshrl.u32 %v807, 7
        %v809 = vsub.s32 0, %v808
        %v810 = vrot.slane %v805, %v809
        %v813 = vsel %vm396, %v763, 0
        %v816 = vsel %vm396, %v768, 0
        %v819 = vsel %vm396, %v773, 0
        %v822 = vsel %vm396, %v778, 0
        %v825 = vsel %vm396, %v783, 0
        %v828 = vsel %vm396, %v788, 0
        %v831 = vsel %vm396, %v793, 0
        %v834 = vsel %vm396, %v798, 0
        %836 = vmatprep.subr.mxu0 0.0
        %837 = vmatpush1.msra.mxu0 %v801
        %838 = vmatprep.subr.mxu0 0.0
        %839 = vmatpush1.msra.mxu0 %v802
        %840 = vmatprep.subr.mxu0 0.0
        %841 = vmatpush1.msra.mxu0 %v803
        %842 = vmatprep.subr.mxu0 0.0
        %843 = vmatpush1.msra.mxu0 %v804
        %844 = vmatprep.subr.mxu0 0.0
        %845 = vmatpush1.msra.mxu0 0.0
        %846 = vmatprep.subr.mxu0 0.0
        %847 = vmatpush1.msra.mxu0 0.0
        %848 = vmatprep.subr.mxu0 0.0
        %849 = vmatpush1.msra.mxu0 0.0
        %850 = vmatprep.subr.mxu0 0.0
        %851 = vmatpush1.msra.mxu0 0.0
        %852 = vmatprep.subr.mxu0 0.0
        %853 = vmatpush1.msra.mxu0 0.0
        %854 = vmatprep.subr.mxu0 0.0
        %855 = vmatpush1.msra.mxu0 0.0
        %856 = vmatprep.subr.mxu0 0.0
        %857 = vmatpush1.msra.mxu0 0.0
        %858 = vmatprep.subr.mxu0 0.0
        %859 = vmatpush1.msra.mxu0 0.0
        %860 = vmatprep.subr.mxu0 0.0
        %861 = vmatpush1.msra.mxu0 0.0
        %862 = vmatprep.subr.mxu0 0.0
        %863 = vmatpush1.msra.mxu0 0.0
        %864 = vmatprep.subr.mxu0 0.0
        %865 = vmatpush1.msra.mxu0 0.0
        %866 = vmatprep.subr.mxu0 0.0
        %867 = vmatpush1.msra.mxu0 0.0
        %868 = vmatprep.subr.mxu0 0.0
        %869 = vmatpush1.msra.mxu0 0.0
        %870 = vmatprep.subr.mxu0 0.0
        %871 = vmatpush1.msra.mxu0 0.0
        %872 = vmatprep.subr.mxu0 0.0
        %873 = vmatpush1.msra.mxu0 0.0
        %874 = vmatprep.subr.mxu0 0.0
        %875 = vmatpush1.msra.mxu0 0.0
        %876 = vmatprep.subr.mxu0 0.0
        %877 = vmatpush1.msra.mxu0 0.0
        %878 = vmatprep.subr.mxu0 0.0
        %879 = vmatpush1.msra.mxu0 0.0
        %880 = vmatprep.subr.mxu0 0.0
        %881 = vmatpush1.msra.mxu0 0.0
        %882 = vmatprep.subr.mxu0 0.0
        %883 = vmatpush1.msra.mxu0 0.0
        %884 = vmatprep.subr.mxu0 0.0
        %885 = vmatpush1.msra.mxu0 0.0
        %886 = vmatprep.subr.mxu0 0.0
        %887 = vmatpush1.msra.mxu0 0.0
        %888 = vmatprep.subr.mxu0 0.0
        %889 = vmatpush1.msra.mxu0 0.0
        %890 = vmatprep.subr.mxu0 0.0
        %891 = vmatpush1.msra.mxu0 0.0
        %892 = vmatprep.subr.mxu0 0.0
        %893 = vmatpush1.msra.mxu0 0.0
        %894 = vmatprep.subr.mxu0 0.0
        %895 = vmatpush1.msra.mxu0 0.0
        %896 = vmatprep.subr.mxu0 0.0
        %897 = vmatpush1.msra.mxu0 0.0
        %898 = vmatprep.subr.mxu0 0.0
        %899 = vmatpush1.msra.mxu0 0.0
        %900 = vmatprep.mubr.f32.mxu0 0.0
        %901 = vmatmul.mubr.f32.gmra.mrb[0].mxu0 %v813
        %v902 = vpop.f32.mrb[0].mxu0
        %v903 = vadd.f32 %v810, %v902
        %v904 = vpop.f32.mrb[0].mxu0
        %905 = vmatprep.mubr.f32.mxu0 0.0
        %906 = vmatmul.mubr.f32.gmra.mrb[0].mxu0 %v816
        %v907 = vpop.f32.mrb[0].mxu0
        %v908 = vadd.f32 %v810, %v907
        %v909 = vpop.f32.mrb[0].mxu0
        %910 = vmatprep.mubr.f32.mxu0 0.0
        %911 = vmatmul.mubr.f32.gmra.mrb[0].mxu0 %v819
        %v912 = vpop.f32.mrb[0].mxu0
        %v913 = vadd.f32 %v810, %v912
        %v914 = vpop.f32.mrb[0].mxu0
        %915 = vmatprep.mubr.f32.mxu0 0.0
        %916 = vmatmul.mubr.f32.gmra.mrb[0].mxu0 %v822
        %v917 = vpop.f32.mrb[0].mxu0
        %v918 = vadd.f32 %v810, %v917
        %v919 = vpop.f32.mrb[0].mxu0
        %920 = vmatprep.mubr.f32.mxu0 0.0
        %921 = vmatmul.mubr.f32.gmra.mrb[0].mxu0 %v825
        %v922 = vpop.f32.mrb[0].mxu0
        %v923 = vadd.f32 %v810, %v922
        %v924 = vpop.f32.mrb[0].mxu0
        %925 = vmatprep.mubr.f32.mxu0 0.0
        %926 = vmatmul.mubr.f32.gmra.mrb[0].mxu0 %v828
        %v927 = vpop.f32.mrb[0].mxu0
        %v928 = vadd.f32 %v810, %v927
        %v929 = vpop.f32.mrb[0].mxu0
        %930 = vmatprep.mubr.f32.mxu0 0.0
        %931 = vmatmul.mubr.f32.gmra.mrb[0].mxu0 %v831
        %v932 = vpop.f32.mrb[0].mxu0
        %v933 = vadd.f32 %v810, %v932
        %v934 = vpop.f32.mrb[0].mxu0
        %935 = vmatprep.mubr.f32.mxu0 0.0
        %936 = vmatmul.mubr.f32.gmra.mrb[0].mxu0 %v834
        %v937 = vpop.f32.mrb[0].mxu0
        %v938 = vadd.f32 %v810, %v937
        %v939 = vpop.f32.mrb[0].mxu0
        %940 = vdwg.mxu0
        %v941 = vld [vmem:[%s363] sm:$0xff]
        %v942 = vld [vmem:[%s363 + $0x8] sm:$0xff]
        %v943 = vld [vmem:[%s363 + $0x10] sm:$0xff]
        %v944 = vld [vmem:[%s363 + $0x18] sm:$0xff]
        %v945 = vld [vmem:[%s363 + $0x20] sm:$0xff]
        %v946 = vld [vmem:[%s363 + $0x28] sm:$0xff]
        %v947 = vld [vmem:[%s363 + $0x30] sm:$0xff]
        %v948 = vld [vmem:[%s363 + $0x38] sm:$0xff]
        %v949 = vadd.f32 %v903, %v941
        %v950 = vadd.f32 %v908, %v942
        %v951 = vadd.f32 %v913, %v943
        %v952 = vadd.f32 %v918, %v944
        %v953 = vadd.f32 %v923, %v945
        %v954 = vadd.f32 %v928, %v946
        %v955 = vadd.f32 %v933, %v947
        %v956 = vadd.f32 %v938, %v948
        %957 = vst.msk [vmem:[%s343] sm:$0xff] %vm396, %v949
        %958 = vst.msk [vmem:[%s343 + $0x8] sm:$0xff] %vm396, %v950
        %959 = vst.msk [vmem:[%s343 + $0x10] sm:$0xff] %vm396, %v951
        %960 = vst.msk [vmem:[%s343 + $0x18] sm:$0xff] %vm396, %v952
        %961 = vst.msk [vmem:[%s343 + $0x20] sm:$0xff] %vm396, %v953
        %962 = vst.msk [vmem:[%s343 + $0x28] sm:$0xff] %vm396, %v954
        %963 = vst.msk [vmem:[%s343 + $0x30] sm:$0xff] %vm396, %v955
        %964 = vst.msk [vmem:[%s343 + $0x38] sm:$0xff] %vm396, %v956
        %s965 = sand.u32 %s218, 1
        %s966 = scalar_lea.sflag [#allocation3], %s965
        %s967 = sand.u32 %s218, 1
        %s968 = smul.addr %s967, 64
        %s969 = scalar_lea.vmem [#allocation2], %s968
        // Predicated region
        $region53: #{multi_head_attention_forward.5} parent=51 // pred_check
          %p970 = pneg %p228
        $region54: #{multi_head_attention_forward.5} parent=51 // pred_check_branch
          %972 = sbr.rel (%p970) target = $region56
        $region55: #{multi_head_attention_forward.5} parent=51 // pred_region
          %s974 = ssub.s32 1024, 1024
          %975 = vsyncadd %s966, %s974
          %s976 = smul.addr %s22, 8
          %s977 = smul.addr %s976, 128
          %s978 = scalar_lea.hbm %s8, %s977
          %s979 = sshll.u32 %s969, 4
          %s980 = int_to_ptr.vmem [resolvable:$true] %s979
          %985 = dma.vmem_to_hbm [thread:$0]  %s980, 1024, %s978, %s966, 128, 128, 8
        $region56: #{multi_head_attention_forward.5} parent=51 // pred_fallthru
          _
      $region52: #{multi_head_attention_forward.5} parent=5 // pred_fallthru
        _
      %p986 = scmp.le.s32.totalorder 2, %s17
      // Predicated region
      $region57: #{multi_head_attention_forward.5} parent=5 // pred_check
        %p987 = pneg %p986
      $region58: #{multi_head_attention_forward.5} parent=5 // pred_check_branch
        %989 = sbr.rel (%p987) target = $region60
      $region59: #{multi_head_attention_forward.5} parent=5 // pred_region
        %s990 = ssub.s32 %s17, 2
        // Predicated region
        $region61: #{multi_head_attention_forward.5} parent=59 // pred_check
          %p991 = pneg %p234
        $region62: #{multi_head_attention_forward.5} parent=59 // pred_check_branch
          %993 = sbr.rel (%p991) target = $region64
        $region63: #{multi_head_attention_forward.5} parent=59 // pred_region
          %s994 = sand.u32 %s219, 1
          %s995 = scalar_lea.sflag [#allocation3], %s994
          %s996 = sand.u32 %s219, 1
          %s997 = smul.addr %s996, 64
          %s998 = scalar_lea.vmem [#allocation2], %s997
          %999 = dma.done %s995, 1024
        $region64: #{multi_head_attention_forward.5} parent=59 // pred_fallthru
          _
      $region60: #{multi_head_attention_forward.5} parent=5 // pred_fallthru
        _
    $region6: #{multi_head_attention_forward.5} parent=1 // loop_footer
      %s21 = sadd.s32 1, %s17
    $region7: #{multi_head_attention_forward.5} parent=1 // loop_footer_branch
      %16 = sbr.rel target = $region3
    $region8: #{multi_head_attention_forward.5} parent=1 // loop_exit
      _
    %1000 = vsyncpa [#allocation3], 1
    %s1001 = scalar_lea.sflag [#allocation3], 1
    %1002 = vsyncpa %s1001, 1

</llo_original>
